<compile_context>
chip_gen: v7x
topology: tpu7x:2x2x1
jax: 0.10.0
libtpu: 0.0.40
codegen_flags: <defaults>
</compile_context>

<pallas_src>
import functools

import jax
import jax.numpy as jnp
from jax.experimental import pallas as pl
from jax.experimental.pallas import tpu as pltpu


# -----------------------------------------------------------------------------
# Fused kernel: one batch element per grid step, all heads inside.
# -----------------------------------------------------------------------------
def fused_attention_kernel(q_ref, k_ref, v_ref, mask_ref,
                           wq_ref, wk_ref, wv_ref, wfc_ref, bfc_ref,
                           o_ref):
    _, Lq, H, Dh = q_ref.shape
    Lk = k_ref.shape[1]
    E = H * Dh

    contract_last = (((1,), (1,)), ((), ()))   # x[..., d] . w[out, d]

    # ---- per-head Q/K/V projections, heads folded into the M dimension ------
    q2 = q_ref[0].reshape(Lq * H, Dh)
    k2 = k_ref[0].reshape(Lk * H, Dh)
    v2 = v_ref[0].reshape(Lk * H, Dh)

    Q = jax.lax.dot_general(q2, wq_ref[...], contract_last,
                            preferred_element_type=jnp.float32).reshape(Lq, H, Dh)
    K = jax.lax.dot_general(k2, wk_ref[...], contract_last,
                            preferred_element_type=jnp.float32).reshape(Lk, H, Dh)
    V = jax.lax.dot_general(v2, wv_ref[...], contract_last,
                            preferred_element_type=jnp.float32).reshape(Lk, H, Dh)

    # head-leading layout for the batched score / context matmuls
    Qh = jnp.transpose(Q, (1, 0, 2))   # [H, Lq, Dh]
    Kh = jnp.transpose(K, (1, 0, 2))   # [H, Lk, Dh]
    Vh = jnp.transpose(V, (1, 0, 2))   # [H, Lk, Dh]

    # ---- scaled, masked softmax attention -----------------------------------
    energy = jnp.einsum('hqd,hkd->hqk', Qh, Kh,
                        preferred_element_type=jnp.float32)        # [H, Lq, Lk]
    energy = energy * jnp.float32(1.0 / (Dh ** 0.5))
    m = mask_ref[0]                                                # [Lq, Lk]
    energy = jnp.where(m[None, :, :] == 0, jnp.float32(-1e20), energy)

    emax = jnp.max(energy, axis=-1, keepdims=True)
    p = jnp.exp(energy - emax)
    denom = jnp.sum(p, axis=-1, keepdims=True)
    attn = p * pl.reciprocal(denom, approx=True)                   # EUP vrcp

    ctx = jnp.einsum('hqk,hkd->hqd', attn, Vh,
                     preferred_element_type=jnp.float32)           # [H, Lq, Dh]
    ctx = jnp.transpose(ctx, (1, 0, 2)).reshape(Lq, E)             # [Lq, E]

    # ---- fc_out: y = ctx @ W^T + b (lane-dense [Lq, E] store) ---------------
    out = jax.lax.dot_general(ctx, wfc_ref[...], contract_last,
                              preferred_element_type=jnp.float32)
    o_ref[0] = (out + bfc_ref[...]).astype(o_ref.dtype)


# -----------------------------------------------------------------------------
# Wrapper
# -----------------------------------------------------------------------------
def self_attention_forward(query, key, value, mask, params, heads):
    N, Lq, E = query.shape
    Lk = key.shape[1]
    Dh = E // heads
    assert E == heads * Dh, "embed_size should be divisible by heads"

    # Free reshapes only (no host-side head transpose / no per-head mask copy).
    q4 = query.reshape(N, Lq, heads, Dh)
    k4 = key.reshape(N, Lk, heads, Dh)
    v4 = value.reshape(N, Lk, heads, Dh)
    # Head-independent mask (the standard [N, 1, Lq, Lk] / [N, 1, 1, Lk] case).
    mask3 = jnp.broadcast_to(mask, (N, 1, Lq, Lk)).reshape(N, Lq, Lk)
    mask3 = mask3.astype(jnp.float32)

    return pl.pallas_call(
        fused_attention_kernel,
        out_shape=jax.ShapeDtypeStruct((N, Lq, E), jnp.float32),
        grid=(N,),
        in_specs=[
            pl.BlockSpec((1, Lq, heads, Dh), lambda n: (n, 0, 0, 0)),
            pl.BlockSpec((1, Lk, heads, Dh), lambda n: (n, 0, 0, 0)),
            pl.BlockSpec((1, Lk, heads, Dh), lambda n: (n, 0, 0, 0)),
            pl.BlockSpec((1, Lq, Lk), lambda n: (n, 0, 0)),
            pl.BlockSpec((Dh, Dh), lambda n: (0, 0)),
            pl.BlockSpec((Dh, Dh), lambda n: (0, 0)),
            pl.BlockSpec((Dh, Dh), lambda n: (0, 0)),
            pl.BlockSpec((E, E), lambda n: (0, 0)),
            pl.BlockSpec((1, E), lambda n: (0, 0)),
        ],
        out_specs=pl.BlockSpec((1, Lq, E), lambda n: (n, 0, 0)),
        compiler_params=pltpu.CompilerParams(
            dimension_semantics=("parallel",)),
    )(q4, k4, v4, mask3,
      params["wq"], params["wk"], params["wv"],
      params["w_fc"], params["b_fc"].reshape(1, E))


# -----------------------------------------------------------------------------
# Pure-JAX reference (mirrors the PyTorch forward exactly)
# -----------------------------------------------------------------------------
def ref_self_attention(query, key, value, mask, p, heads):
    N, Lq, E = query.shape
    Lk = key.shape[1]
    Dh = E // heads
    qh = query.reshape(N, Lq, heads, Dh)
    kh = key.reshape(N, Lk, heads, Dh)
    vh = value.reshape(N, Lk, heads, Dh)
    Q = jnp.einsum("nlhd,ed->nlhe", qh, p["wq"])
    K = jnp.einsum("nlhd,ed->nlhe", kh, p["wk"])
    V = jnp.einsum("nlhd,ed->nlhe", vh, p["wv"])
    energy = jnp.einsum("nqhd,nkhd->nhqk", Q, K)
    energy = energy / jnp.sqrt(jnp.float32(Dh))
    energy = jnp.where(mask == 0, jnp.float32(-1e20), energy)
    attn = jax.nn.softmax(energy, axis=3)
    out = jnp.einsum("nhqk,nkhd->nqhd", attn, V).reshape(N, Lq, E)
    return out @ p["w_fc"].T + p["b_fc"]


# -----------------------------------------------------------------------------
# Main
# -----------------------------------------------------------------------------
if __name__ == "__main__":
    N, L, E, HEADS = 2, 8, 32, 4
    DH = E // HEADS

    root = jax.random.PRNGKey(0)
    ks = jax.random.split(root, 8)

    params = {
        "wq": 0.2 * jax.random.normal(ks[0], (DH, DH), jnp.float32),
        "wk": 0.2 * jax.random.normal(ks[1], (DH, DH), jnp.float32),
        "wv": 0.2 * jax.random.normal(ks[2], (DH, DH), jnp.float32),
        "w_fc": 0.1 * jax.random.normal(ks[3], (E, E), jnp.float32),
        "b_fc": 0.05 * jax.random.normal(ks[4], (E,), jnp.float32),
    }

    query = jax.random.normal(ks[5], (N, L, E), jnp.float32)
    key_t = jax.random.normal(ks[6], (N, L, E), jnp.float32)
    value = jax.random.normal(ks[7], (N, L, E), jnp.float32)
    # causal mask [N, 1, Lq, Lk] (head-independent, PyTorch-style)
    mask = jnp.broadcast_to(jnp.tril(jnp.ones((L, L), jnp.float32))[None, None],
                            (N, 1, L, L))

    fwd = jax.jit(functools.partial(self_attention_forward, heads=HEADS))
    out = fwd(query, key_t, value, mask, params)
    out = jax.block_until_ready(out)

    ref = ref_self_attention(query, key_t, value, mask, params, HEADS)
    assert out.shape == (N, L, E)
    assert jnp.allclose(out, ref, rtol=2e-3, atol=2e-3), "mismatch vs reference"

    print("KERNEL_OK")
</pallas_src>

<mosaic_0001>
module attributes {stable_mosaic.version = 11 : i64} {
  func.func @fused_attention_kernel(%arg0: i32, %arg1: memref<1x8x4x8xf32, #tpu.memory_space<vmem>>, %arg2: memref<1x8x4x8xf32, #tpu.memory_space<vmem>>, %arg3: memref<1x8x4x8xf32, #tpu.memory_space<vmem>>, %arg4: memref<1x8x8xf32, #tpu.memory_space<vmem>>, %arg5: memref<8x8xf32, #tpu.memory_space<vmem>>, %arg6: memref<8x8xf32, #tpu.memory_space<vmem>>, %arg7: memref<8x8xf32, #tpu.memory_space<vmem>>, %arg8: memref<32x32xf32, #tpu.memory_space<vmem>>, %arg9: memref<1x32xf32, #tpu.memory_space<vmem>>, %arg10: memref<1x8x32xf32, #tpu.memory_space<vmem>>) attributes {dimension_semantics = [#tpu.dimension_semantics<parallel>], iteration_bounds = array<i64: 2>, scalar_prefetch = 0 : i64, scratch_operands = 0 : i64, tpu.core_type = #tpu.core_type<tc>, window_params = [{transform_indices = @transform_0, window_bounds = array<i64: 1, 8, 4, 8>}, {transform_indices = @transform_1, window_bounds = array<i64: 1, 8, 4, 8>}, {transform_indices = @transform_2, window_bounds = array<i64: 1, 8, 4, 8>}, {transform_indices = @transform_3, window_bounds = array<i64: 1, 8, 8>}, {pipeline_mode = #tpu.pipeline_mode<synchronous>, transform_indices = @transform_4, window_bounds = array<i64: 8, 8>}, {pipeline_mode = #tpu.pipeline_mode<synchronous>, transform_indices = @transform_5, window_bounds = array<i64: 8, 8>}, {pipeline_mode = #tpu.pipeline_mode<synchronous>, transform_indices = @transform_6, window_bounds = array<i64: 8, 8>}, {pipeline_mode = #tpu.pipeline_mode<synchronous>, transform_indices = @transform_7, window_bounds = array<i64: 32, 32>}, {pipeline_mode = #tpu.pipeline_mode<synchronous>, transform_indices = @transform_8, window_bounds = array<i64: 1, 32>}, {transform_indices = @transform_9, window_bounds = array<i64: 1, 8, 32>}]} {
    %c0 = arith.constant 0 : index
    %c0_0 = arith.constant 0 : index
    %c0_1 = arith.constant 0 : index
    %c0_2 = arith.constant 0 : index
    %0 = vector.load %arg1[%c0, %c0_0, %c0_1, %c0_2] : memref<1x8x4x8xf32, #tpu.memory_space<vmem>>, vector<1x8x4x8xf32>
    %1 = vector.shape_cast %0 : vector<1x8x4x8xf32> to vector<8x4x8xf32>
    %2 = vector.shape_cast %1 : vector<8x4x8xf32> to vector<32x8xf32>
    %c0_3 = arith.constant 0 : index
    %c0_4 = arith.constant 0 : index
    %c0_5 = arith.constant 0 : index
    %c0_6 = arith.constant 0 : index
    %3 = vector.load %arg2[%c0_3, %c0_4, %c0_5, %c0_6] : memref<1x8x4x8xf32, #tpu.memory_space<vmem>>, vector<1x8x4x8xf32>
    %4 = vector.shape_cast %3 : vector<1x8x4x8xf32> to vector<8x4x8xf32>
    %5 = vector.shape_cast %4 : vector<8x4x8xf32> to vector<32x8xf32>
    %c0_7 = arith.constant 0 : index
    %c0_8 = arith.constant 0 : index
    %c0_9 = arith.constant 0 : index
    %c0_10 = arith.constant 0 : index
    %6 = vector.load %arg3[%c0_7, %c0_8, %c0_9, %c0_10] : memref<1x8x4x8xf32, #tpu.memory_space<vmem>>, vector<1x8x4x8xf32>
    %7 = vector.shape_cast %6 : vector<1x8x4x8xf32> to vector<8x4x8xf32>
    %8 = vector.shape_cast %7 : vector<8x4x8xf32> to vector<32x8xf32>
    %c0_11 = arith.constant 0 : index
    %c0_12 = arith.constant 0 : index
    %9 = vector.load %arg5[%c0_11, %c0_12] : memref<8x8xf32, #tpu.memory_space<vmem>>, vector<8x8xf32>
    %cst = arith.constant dense<0.000000e+00> : vector<32x8xf32>
    %10 = tpu.matmul %2, %9, %cst {dimension_numbers = #tpu.dot_dimension_numbers<[1], [1], [0], [0], [0, 0, 1, 0], [], []>} : vector<32x8xf32>, vector<8x8xf32>, vector<32x8xf32> -> vector<32x8xf32>
    %11 = vector.shape_cast %10 : vector<32x8xf32> to vector<8x4x8xf32>
    %c0_13 = arith.constant 0 : index
    %c0_14 = arith.constant 0 : index
    %12 = vector.load %arg6[%c0_13, %c0_14] : memref<8x8xf32, #tpu.memory_space<vmem>>, vector<8x8xf32>
    %cst_15 = arith.constant dense<0.000000e+00> : vector<32x8xf32>
    %13 = tpu.matmul %5, %12, %cst_15 {dimension_numbers = #tpu.dot_dimension_numbers<[1], [1], [0], [0], [0, 0, 1, 0], [], []>} : vector<32x8xf32>, vector<8x8xf32>, vector<32x8xf32> -> vector<32x8xf32>
    %14 = vector.shape_cast %13 : vector<32x8xf32> to vector<8x4x8xf32>
    %c0_16 = arith.constant 0 : index
    %c0_17 = arith.constant 0 : index
    %15 = vector.load %arg7[%c0_16, %c0_17] : memref<8x8xf32, #tpu.memory_space<vmem>>, vector<8x8xf32>
    %cst_18 = arith.constant dense<0.000000e+00> : vector<32x8xf32>
    %16 = tpu.matmul %8, %15, %cst_18 {dimension_numbers = #tpu.dot_dimension_numbers<[1], [1], [0], [0], [0, 0, 1, 0], [], []>} : vector<32x8xf32>, vector<8x8xf32>, vector<32x8xf32> -> vector<32x8xf32>
    %17 = vector.shape_cast %16 : vector<32x8xf32> to vector<8x4x8xf32>
    %18 = tpu.transpose %11, [1, 0, 2] : vector<8x4x8xf32> -> vector<4x8x8xf32>
    %19 = tpu.transpose %14, [1, 0, 2] : vector<8x4x8xf32> -> vector<4x8x8xf32>
    %20 = tpu.transpose %17, [1, 0, 2] : vector<8x4x8xf32> -> vector<4x8x8xf32>
    "tpu.trace_start"() <{level = 10 : i32, message = "hqd,hkd->hqk"}> : () -> ()
    %cst_19 = arith.constant dense<0.000000e+00> : vector<4x8x8xf32>
    %21 = tpu.matmul %18, %19, %cst_19 {dimension_numbers = #tpu.dot_dimension_numbers<[2], [2], [1], [1], [0, 0, 0, 1, 1, 1], [0], [0]>} : vector<4x8x8xf32>, vector<4x8x8xf32>, vector<4x8x8xf32> -> vector<4x8x8xf32>
    "tpu.trace_stop"() : () -> ()
    %cst_20 = arith.constant 0.353553385 : f32
    %22 = vector.broadcast %cst_20 : f32 to vector<4x8x8xf32>
    %23 = arith.mulf %21, %22 : vector<4x8x8xf32>
    %c0_21 = arith.constant 0 : index
    %c0_22 = arith.constant 0 : index
    %c0_23 = arith.constant 0 : index
    %24 = vector.load %arg4[%c0_21, %c0_22, %c0_23] : memref<1x8x8xf32, #tpu.memory_space<vmem>>, vector<1x8x8xf32>
    %25 = vector.shape_cast %24 : vector<1x8x8xf32> to vector<8x8xf32>
    %26 = vector.shape_cast %25 : vector<8x8xf32> to vector<1x8x8xf32>
    %cst_24 = arith.constant 0.000000e+00 : f32
    %27 = vector.broadcast %cst_24 : f32 to vector<1x8x8xf32>
    %28 = arith.cmpf oeq, %26, %27 : vector<1x8x8xf32>
    %cst_25 = arith.constant -1.000000e+20 : f32
    %29 = vector.shape_cast %28 : vector<1x8x8xi1> to vector<1x8x8xi1>
    %30 = vector.broadcast %29 : vector<1x8x8xi1> to vector<4x8x8xi1>
    %31 = vector.broadcast %cst_25 : f32 to vector<4x8x8xf32>
    %32 = arith.select %30, %31, %23 : vector<4x8x8xi1>, vector<4x8x8xf32>
    %cst_26 = arith.constant dense<0xFF800000> : vector<4x8xf32>
    %33 = vector.multi_reduction <maximumf>, %32, %cst_26 [2] : vector<4x8x8xf32> to vector<4x8xf32>
    %34 = vector.shape_cast %33 : vector<4x8xf32> to vector<4x8x1xf32>
    %35 = vector.broadcast %34 : vector<4x8x1xf32> to vector<4x8x8xf32>
    %36 = arith.subf %32, %35 : vector<4x8x8xf32>
    %37 = math.exp %36 : vector<4x8x8xf32>
    %cst_27 = arith.constant dense<0.000000e+00> : vector<4x8xf32>
    %38 = vector.multi_reduction <add>, %37, %cst_27 [2] : vector<4x8x8xf32> to vector<4x8xf32>
    %39 = vector.shape_cast %38 : vector<4x8xf32> to vector<4x8x1xf32>
    %40 = tpu.reciprocal %39 {approx = true} : vector<4x8x1xf32> -> vector<4x8x1xf32>
    %41 = vector.broadcast %40 : vector<4x8x1xf32> to vector<4x8x8xf32>
    %42 = arith.mulf %37, %41 : vector<4x8x8xf32>
    "tpu.trace_start"() <{level = 10 : i32, message = "hqk,hkd->hqd"}> : () -> ()
    %cst_28 = arith.constant dense<0.000000e+00> : vector<4x8x8xf32>
    %43 = tpu.matmul %42, %20, %cst_28 {dimension_numbers = #tpu.dot_dimension_numbers<[2], [1], [1], [2], [0, 0, 0, 1, 1, 2], [0], [0]>} : vector<4x8x8xf32>, vector<4x8x8xf32>, vector<4x8x8xf32> -> vector<4x8x8xf32>
    "tpu.trace_stop"() : () -> ()
    %44 = tpu.transpose %43, [1, 0, 2] : vector<4x8x8xf32> -> vector<8x4x8xf32>
    %45 = vector.shape_cast %44 : vector<8x4x8xf32> to vector<8x32xf32>
    %c0_29 = arith.constant 0 : index
    %c0_30 = arith.constant 0 : index
    %46 = vector.load %arg8[%c0_29, %c0_30] : memref<32x32xf32, #tpu.memory_space<vmem>>, vector<32x32xf32>
    %cst_31 = arith.constant dense<0.000000e+00> : vector<8x32xf32>
    %47 = tpu.matmul %45, %46, %cst_31 {dimension_numbers = #tpu.dot_dimension_numbers<[1], [1], [0], [0], [0, 0, 1, 0], [], []>} : vector<8x32xf32>, vector<32x32xf32>, vector<8x32xf32> -> vector<8x32xf32>
    %c0_32 = arith.constant 0 : index
    %c0_33 = arith.constant 0 : index
    %48 = vector.load %arg9[%c0_32, %c0_33] : memref<1x32xf32, #tpu.memory_space<vmem>>, vector<1x32xf32>
    %49 = vector.broadcast %48 : vector<1x32xf32> to vector<8x32xf32>
    %50 = arith.addf %47, %49 : vector<8x32xf32>
    %c0_34 = arith.constant 0 : index
    %c0_35 = arith.constant 0 : index
    %c0_36 = arith.constant 0 : index
    %51 = vector.load %arg10[%c0_34, %c0_35, %c0_36] : memref<1x8x32xf32, #tpu.memory_space<vmem>>, vector<1x8x32xf32>
    %52 = vector.shape_cast %51 : vector<1x8x32xf32> to vector<8x32xf32>
    %53 = vector.shape_cast %50 : vector<8x32xf32> to vector<1x8x32xf32>
    tpu.vector_store %arg10[%c0_34, %c0_35, %c0_36], %53 {strides = array<i32>} : memref<1x8x32xf32, #tpu.memory_space<vmem>>, vector<1x8x32xf32>,
    return
  }
  func.func @transform_0(%arg0: i32) -> (i32, i32, i32, i32) {
    %c0_i32 = arith.constant 0 : i32
    %c0_i32_0 = arith.constant 0 : i32
    %c0_i32_1 = arith.constant 0 : i32
    %c0_i32_2 = arith.constant 0 : i32
    return %arg0, %c0_i32, %c0_i32_0, %c0_i32_1 : i32, i32, i32, i32
  }
  func.func @transform_1(%arg0: i32) -> (i32, i32, i32, i32) {
    %c0_i32 = arith.constant 0 : i32
    %c0_i32_0 = arith.constant 0 : i32
    %c0_i32_1 = arith.constant 0 : i32
    %c0_i32_2 = arith.constant 0 : i32
    return %arg0, %c0_i32, %c0_i32_0, %c0_i32_1 : i32, i32, i32, i32
  }
  func.func @transform_2(%arg0: i32) -> (i32, i32, i32, i32) {
    %c0_i32 = arith.constant 0 : i32
    %c0_i32_0 = arith.constant 0 : i32
    %c0_i32_1 = arith.constant 0 : i32
    %c0_i32_2 = arith.constant 0 : i32
    return %arg0, %c0_i32, %c0_i32_0, %c0_i32_1 : i32, i32, i32, i32
  }
  func.func @transform_3(%arg0: i32) -> (i32, i32, i32) {
    %c0_i32 = arith.constant 0 : i32
    %c0_i32_0 = arith.constant 0 : i32
    %c0_i32_1 = arith.constant 0 : i32
    return %arg0, %c0_i32, %c0_i32_0 : i32, i32, i32
  }
  func.func @transform_4(%arg0: i32) -> (i32, i32) {
    %c0_i32 = arith.constant 0 : i32
    %c0_i32_0 = arith.constant 0 : i32
    %c0_i32_1 = arith.constant 0 : i32
    return %c0_i32, %c0_i32_0 : i32, i32
  }
  func.func @transform_5(%arg0: i32) -> (i32, i32) {
    %c0_i32 = arith.constant 0 : i32
    %c0_i32_0 = arith.constant 0 : i32
    %c0_i32_1 = arith.constant 0 : i32
    return %c0_i32, %c0_i32_0 : i32, i32
  }
  func.func @transform_6(%arg0: i32) -> (i32, i32) {
    %c0_i32 = arith.constant 0 : i32
    %c0_i32_0 = arith.constant 0 : i32
    %c0_i32_1 = arith.constant 0 : i32
    return %c0_i32, %c0_i32_0 : i32, i32
  }
  func.func @transform_7(%arg0: i32) -> (i32, i32) {
    %c0_i32 = arith.constant 0 : i32
    %c0_i32_0 = arith.constant 0 : i32
    %c0_i32_1 = arith.constant 0 : i32
    return %c0_i32, %c0_i32_0 : i32, i32
  }
  func.func @transform_8(%arg0: i32) -> (i32, i32) {
    %c0_i32 = arith.constant 0 : i32
    %c0_i32_0 = arith.constant 0 : i32
    %c0_i32_1 = arith.constant 0 : i32
    return %c0_i32, %c0_i32_0 : i32, i32
  }
  func.func @transform_9(%arg0: i32) -> (i32, i32, i32) {
    %c0_i32 = arith.constant 0 : i32
    %c0_i32_0 = arith.constant 0 : i32
    %c0_i32_1 = arith.constant 0 : i32
    return %arg0, %c0_i32, %c0_i32_0 : i32, i32, i32
  }
}

</mosaic_0001>

<llo_original>
// kernel: self_attention_forward.1
$region0: #{self_attention_forward.1}
  #allocation0 [shape = 'u32[]', space=smem, size = 0x4, offset = 0x4, fixed_abs, tag = 'smem constant byte address 0x4 - core index']
  #allocation1 [shape = 'u32[144,128]{1,0:T(1,128)}', space=vmem, size = 0x12000, scoped, tag = 'internal scratch']
  %s0 = inlined_call_operand.vmem [shape: f32[2,8,4,8], index: 0, kind: input, shape index: {}]
  %s1 = inlined_call_operand.vmem [shape: f32[2,8,4,8], index: 1, kind: input, shape index: {}]
  %s2 = inlined_call_operand.vmem [shape: f32[2,8,4,8], index: 2, kind: input, shape index: {}]
  %s3 = inlined_call_operand.vmem [shape: f32[2,8,8], index: 3, kind: input, shape index: {}]
  %s4 = inlined_call_operand.vmem [shape: f32[8,8], index: 4, kind: input, shape index: {}]
  %s5 = inlined_call_operand.vmem [shape: f32[8,8], index: 5, kind: input, shape index: {}]
  %s6 = inlined_call_operand.vmem [shape: f32[8,8], index: 6, kind: input, shape index: {}]
  %s7 = inlined_call_operand.vmem [shape: f32[32,32], index: 7, kind: input, shape index: {}]
  %s8 = inlined_call_operand.vmem [shape: f32[1,32], index: 8, kind: input, shape index: {}]
  %s9 = inlined_call_operand.hbm [shape: f32[2,8,32], index: 9, kind: output, shape index: {}]
  %s10 = sld [smem:[#allocation0]]
  $region69: #{self_attention_forward.1} parent=0
    _
  %s12 = ssub.s32 1, %s10
  %s13 = scalar_select 0, %s12, %s10
  $region1: #{self_attention_forward.1} parent=0
    #allocation2 [shape = 'u8[8192]{0}', space=vmem, size = 0x2000, scoped, tag = 'output window, operand 0']
    #allocation3 [shape = 's32[2]{0}', space=sflag, size = 0x8, scoped, tag = 'scoped memory for self_attention_forward.1']
    %14 = vsyncpa [#allocation3], 0
    %s15 = scalar_lea.sflag [#allocation3], 1
    %16 = vsyncpa %s15, 0
    loop: start=0, step=1, limit=4
    $region2: #{self_attention_forward.1} parent=1 // loop_pre_header
      _
    $region3: #{self_attention_forward.1} parent=1 // loop_header
      %s18 = sphi 0, %s22
      %p19 = scmp.ge.s32.totalorder %s18, 4
      %s28 = sphi 0, %s30
      %s31 = sphi 0, %s28
      %s32 = sphi 0, %s31
      %s48 = sphi 0, %s32
      %s54 = sphi 0, %s56
      %s57 = sphi 0, %s54
      %s58 = sphi 0, %s57
      %s74 = sphi 0, %s58
      %s80 = sphi 0, %s82
      %s83 = sphi 0, %s80
      %s84 = sphi 0, %s83
      %s100 = sphi 0, %s84
      %s106 = sphi 0, %s108
      %s109 = sphi 0, %s106
      %s110 = sphi 0, %s109
      %s126 = sphi 0, %s110
      %s130 = sphi 0, %s130
      %s132 = sphi 0, %s130
      %s133 = sphi 0, %s132
      %s147 = sphi 0, %s133
      %s151 = sphi 0, %s151
      %s153 = sphi 0, %s151
      %s154 = sphi 0, %s153
      %s168 = sphi 0, %s154
      %s172 = sphi 0, %s172
      %s174 = sphi 0, %s172
      %s175 = sphi 0, %s174
      %s189 = sphi 0, %s175
      %s193 = sphi 0, %s193
      %s195 = sphi 0, %s193
      %s196 = sphi 0, %s195
      %s210 = sphi 0, %s196
      %s214 = sphi 0, %s214
      %s216 = sphi 0, %s214
      %s217 = sphi 0, %s216
      %s231 = sphi 0, %s217
      %s237 = sphi 0, %s239
      %s240 = sphi 0, %s237
      %s241 = sphi 0, %s240
      %s257 = sphi 0, %s241
    $region4: #{self_attention_forward.1} parent=1 // loop_header_branch
      %21 = sbr.rel (%p19) target = $region8
    $region5: #{self_attention_forward.1} parent=1 // loop_body
      %s23 = ssub.s32 %s18, 1
      %s24 = ssub.s32 %s18, 2
      %s25 = sadd.s32 %s18, 1
      %s26 = ssub.s32 %s18, %s25
      %p27 = scmp.eq.s32.totalorder %s26, 0
      %s29 = sadd.s32 %s28, 1
      %s30 = scalar_select %p27, %s28, %s29
      %p33 = pneg %p27
      %p34 = scmp.eq.s32.totalorder %s18, 1
      %p35 = por %p33, %p34
      %p36 = scmp.ne.s32.totalorder %s28, %s31
      %p37 = scmp.eq.s32.totalorder %s18, 0
      %p38 = por %p36, %p37
      %p39 = scmp.ne.s32.totalorder %s28, %s31
      %p40 = scmp.eq.s32.totalorder %s23, 1
      %p41 = por %p39, %p40
      %p42 = scmp.ne.s32.totalorder %s31, %s32
      %p43 = scmp.eq.s32.totalorder %s23, 0
      %p44 = por %p42, %p43
      %p45 = scmp.ne.s32.totalorder %s31, %s32
      %p46 = scmp.eq.s32.totalorder %s24, 1
      %p47 = por %p45, %p46
      %p49 = scmp.ne.s32.totalorder %s32, %s48
      %p50 = scmp.eq.s32.totalorder %s24, 0
      %p51 = por %p49, %p50
      %s52 = ssub.s32 %s18, %s25
      %p53 = scmp.eq.s32.totalorder %s52, 0
      %s55 = sadd.s32 %s54, 1
      %s56 = scalar_select %p53, %s54, %s55
      %p59 = pneg %p53
      %p60 = scmp.eq.s32.totalorder %s18, 1
      %p61 = por %p59, %p60
      %p62 = scmp.ne.s32.totalorder %s54, %s57
      %p63 = scmp.eq.s32.totalorder %s18, 0
      %p64 = por %p62, %p63
      %p65 = scmp.ne.s32.totalorder %s54, %s57
      %p66 = scmp.eq.s32.totalorder %s23, 1
      %p67 = por %p65, %p66
      %p68 = scmp.ne.s32.totalorder %s57, %s58
      %p69 = scmp.eq.s32.totalorder %s23, 0
      %p70 = por %p68, %p69
      %p71 = scmp.ne.s32.totalorder %s57, %s58
      %p72 = scmp.eq.s32.totalorder %s24, 1
      %p73 = por %p71, %p72
      %p75 = scmp.ne.s32.totalorder %s58, %s74
      %p76 = scmp.eq.s32.totalorder %s24, 0
      %p77 = por %p75, %p76
      %s78 = ssub.s32 %s18, %s25
      %p79 = scmp.eq.s32.totalorder %s78, 0
      %s81 = sadd.s32 %s80, 1
      %s82 = scalar_select %p79, %s80, %s81
      %p85 = pneg %p79
      %p86 = scmp.eq.s32.totalorder %s18, 1
      %p87 = por %p85, %p86
      %p88 = scmp.ne.s32.totalorder %s80, %s83
      %p89 = scmp.eq.s32.totalorder %s18, 0
      %p90 = por %p88, %p89
      %p91 = scmp.ne.s32.totalorder %s80, %s83
      %p92 = scmp.eq.s32.totalorder %s23, 1
      %p93 = por %p91, %p92
      %p94 = scmp.ne.s32.totalorder %s83, %s84
      %p95 = scmp.eq.s32.totalorder %s23, 0
      %p96 = por %p94, %p95
      %p97 = scmp.ne.s32.totalorder %s83, %s84
      %p98 = scmp.eq.s32.totalorder %s24, 1
      %p99 = por %p97, %p98
      %p101 = scmp.ne.s32.totalorder %s84, %s100
      %p102 = scmp.eq.s32.totalorder %s24, 0
      %p103 = por %p101, %p102
      %s104 = ssub.s32 %s18, %s25
      %p105 = scmp.eq.s32.totalorder %s104, 0
      %s107 = sadd.s32 %s106, 1
      %s108 = scalar_select %p105, %s106, %s107
      %p111 = pneg %p105
      %p112 = scmp.eq.s32.totalorder %s18, 1
      %p113 = por %p111, %p112
      %p114 = scmp.ne.s32.totalorder %s106, %s109
      %p115 = scmp.eq.s32.totalorder %s18, 0
      %p116 = por %p114, %p115
      %p117 = scmp.ne.s32.totalorder %s106, %s109
      %p118 = scmp.eq.s32.totalorder %s23, 1
      %p119 = por %p117, %p118
      %p120 = scmp.ne.s32.totalorder %s109, %s110
      %p121 = scmp.eq.s32.totalorder %s23, 0
      %p122 = por %p120, %p121
      %p123 = scmp.ne.s32.totalorder %s109, %s110
      %p124 = scmp.eq.s32.totalorder %s24, 1
      %p125 = por %p123, %p124
      %p127 = scmp.ne.s32.totalorder %s110, %s126
      %p128 = scmp.eq.s32.totalorder %s24, 0
      %p129 = por %p127, %p128
      %s131 = sadd.s32 %s130, 1
      %p134 = scmp.eq.s32.totalorder %s18, 1
      %p135 = scmp.ne.s32.totalorder %s130, %s132
      %p136 = scmp.eq.s32.totalorder %s18, 0
      %p137 = por %p135, %p136
      %p138 = scmp.ne.s32.totalorder %s130, %s132
      %p139 = scmp.eq.s32.totalorder %s23, 1
      %p140 = por %p138, %p139
      %p141 = scmp.ne.s32.totalorder %s132, %s133
      %p142 = scmp.eq.s32.totalorder %s23, 0
      %p143 = por %p141, %p142
      %p144 = scmp.ne.s32.totalorder %s132, %s133
      %p145 = scmp.eq.s32.totalorder %s24, 1
      %p146 = por %p144, %p145
      %p148 = scmp.ne.s32.totalorder %s133, %s147
      %p149 = scmp.eq.s32.totalorder %s24, 0
      %p150 = por %p148, %p149
      %s152 = sadd.s32 %s151, 1
      %p155 = scmp.eq.s32.totalorder %s18, 1
      %p156 = scmp.ne.s32.totalorder %s151, %s153
      %p157 = scmp.eq.s32.totalorder %s18, 0
      %p158 = por %p156, %p157
      %p159 = scmp.ne.s32.totalorder %s151, %s153
      %p160 = scmp.eq.s32.totalorder %s23, 1
      %p161 = por %p159, %p160
      %p162 = scmp.ne.s32.totalorder %s153, %s154
      %p163 = scmp.eq.s32.totalorder %s23, 0
      %p164 = por %p162, %p163
      %p165 = scmp.ne.s32.totalorder %s153, %s154
      %p166 = scmp.eq.s32.totalorder %s24, 1
      %p167 = por %p165, %p166
      %p169 = scmp.ne.s32.totalorder %s154, %s168
      %p170 = scmp.eq.s32.totalorder %s24, 0
      %p171 = por %p169, %p170
      %s173 = sadd.s32 %s172, 1
      %p176 = scmp.eq.s32.totalorder %s18, 1
      %p177 = scmp.ne.s32.totalorder %s172, %s174
      %p178 = scmp.eq.s32.totalorder %s18, 0
      %p179 = por %p177, %p178
      %p180 = scmp.ne.s32.totalorder %s172, %s174
      %p181 = scmp.eq.s32.totalorder %s23, 1
      %p182 = por %p180, %p181
      %p183 = scmp.ne.s32.totalorder %s174, %s175
      %p184 = scmp.eq.s32.totalorder %s23, 0
      %p185 = por %p183, %p184
      %p186 = scmp.ne.s32.totalorder %s174, %s175
      %p187 = scmp.eq.s32.totalorder %s24, 1
      %p188 = por %p186, %p187
      %p190 = scmp.ne.s32.totalorder %s175, %s189
      %p191 = scmp.eq.s32.totalorder %s24, 0
      %p192 = por %p190, %p191
      %s194 = sadd.s32 %s193, 1
      %p197 = scmp.eq.s32.totalorder %s18, 1
      %p198 = scmp.ne.s32.totalorder %s193, %s195
      %p199 = scmp.eq.s32.totalorder %s18, 0
      %p200 = por %p198, %p199
      %p201 = scmp.ne.s32.totalorder %s193, %s195
      %p202 = scmp.eq.s32.totalorder %s23, 1
      %p203 = por %p201, %p202
      %p204 = scmp.ne.s32.totalorder %s195, %s196
      %p205 = scmp.eq.s32.totalorder %s23, 0
      %p206 = por %p204, %p205
      %p207 = scmp.ne.s32.totalorder %s195, %s196
      %p208 = scmp.eq.s32.totalorder %s24, 1
      %p209 = por %p207, %p208
      %p211 = scmp.ne.s32.totalorder %s196, %s210
      %p212 = scmp.eq.s32.totalorder %s24, 0
      %p213 = por %p211, %p212
      %s215 = sadd.s32 %s214, 1
      %p218 = scmp.eq.s32.totalorder %s18, 1
      %p219 = scmp.ne.s32.totalorder %s214, %s216
      %p220 = scmp.eq.s32.totalorder %s18, 0
      %p221 = por %p219, %p220
      %p222 = scmp.ne.s32.totalorder %s214, %s216
      %p223 = scmp.eq.s32.totalorder %s23, 1
      %p224 = por %p222, %p223
      %p225 = scmp.ne.s32.totalorder %s216, %s217
      %p226 = scmp.eq.s32.totalorder %s23, 0
      %p227 = por %p225, %p226
      %p228 = scmp.ne.s32.totalorder %s216, %s217
      %p229 = scmp.eq.s32.totalorder %s24, 1
      %p230 = por %p228, %p229
      %p232 = scmp.ne.s32.totalorder %s217, %s231
      %p233 = scmp.eq.s32.totalorder %s24, 0
      %p234 = por %p232, %p233
      %s235 = ssub.s32 %s18, %s25
      %p236 = scmp.eq.s32.totalorder %s235, 0
      %s238 = sadd.s32 %s237, 1
      %s239 = scalar_select %p236, %s237, %s238
      %p242 = pneg %p236
      %p243 = scmp.eq.s32.totalorder %s18, 1
      %p244 = por %p242, %p243
      %p245 = scmp.ne.s32.totalorder %s237, %s240
      %p246 = scmp.eq.s32.totalorder %s18, 0
      %p247 = por %p245, %p246
      %p248 = scmp.ne.s32.totalorder %s237, %s240
      %p249 = scmp.eq.s32.totalorder %s23, 1
      %p250 = por %p248, %p249
      %p251 = scmp.ne.s32.totalorder %s240, %s241
      %p252 = scmp.eq.s32.totalorder %s23, 0
      %p253 = por %p251, %p252
      %p254 = scmp.ne.s32.totalorder %s240, %s241
      %p255 = scmp.eq.s32.totalorder %s24, 1
      %p256 = por %p254, %p255
      %p258 = scmp.ne.s32.totalorder %s241, %s257
      %p259 = scmp.eq.s32.totalorder %s24, 0
      %p260 = por %p258, %p259
      %p261 = scmp.le.s32.totalorder 1, %s18
      %p262 = scmp.lt.s32.totalorder %s18, 3
      %p263 = pnand %p261, %p262
      %p264 = pneg %p263
      // Predicated region
      $region9: #{self_attention_forward.1} parent=5 // pred_check
        _
      $region10: #{self_attention_forward.1} parent=5 // pred_check_branch
        %266 = sbr.rel (%p263) target = $region12
      $region11: #{self_attention_forward.1} parent=5 // pred_region
        %s267 = ssub.s32 %s18, 1
        // Predicated region
        $region13: #{self_attention_forward.1} parent=11 // pred_check
          %p268 = pneg %p143
        $region14: #{self_attention_forward.1} parent=11 // pred_check_branch
          %270 = sbr.rel (%p268) target = $region16
        $region15: #{self_attention_forward.1} parent=11 // pred_region
          _
        $region16: #{self_attention_forward.1} parent=11 // pred_fallthru
          _
        // Predicated region
        $region17: #{self_attention_forward.1} parent=11 // pred_check
          %p271 = pneg %p164
        $region18: #{self_attention_forward.1} parent=11 // pred_check_branch
          %273 = sbr.rel (%p271) target = $region20
        $region19: #{self_attention_forward.1} parent=11 // pred_region
          _
        $region20: #{self_attention_forward.1} parent=11 // pred_fallthru
          _
        // Predicated region
        $region21: #{self_attention_forward.1} parent=11 // pred_check
          %p274 = pneg %p185
        $region22: #{self_attention_forward.1} parent=11 // pred_check_branch
          %276 = sbr.rel (%p274) target = $region24
        $region23: #{self_attention_forward.1} parent=11 // pred_region
          _
        $region24: #{self_attention_forward.1} parent=11 // pred_fallthru
          _
        // Predicated region
        $region25: #{self_attention_forward.1} parent=11 // pred_check
          %p277 = pneg %p206
        $region26: #{self_attention_forward.1} parent=11 // pred_check_branch
          %279 = sbr.rel (%p277) target = $region28
        $region27: #{self_attention_forward.1} parent=11 // pred_region
          _
        $region28: #{self_attention_forward.1} parent=11 // pred_fallthru
          _
        // Predicated region
        $region29: #{self_attention_forward.1} parent=11 // pred_check
          %p280 = pneg %p227
        $region30: #{self_attention_forward.1} parent=11 // pred_check_branch
          %282 = sbr.rel (%p280) target = $region32
        $region31: #{self_attention_forward.1} parent=11 // pred_region
          _
        $region32: #{self_attention_forward.1} parent=11 // pred_fallthru
          _
      $region12: #{self_attention_forward.1} parent=5 // pred_fallthru
        _
      %p283 = scmp.lt.s32.totalorder %s18, 2
      // Predicated region
      $region33: #{self_attention_forward.1} parent=5 // pred_check
        %p284 = pneg %p283
      $region34: #{self_attention_forward.1} parent=5 // pred_check_branch
        %286 = sbr.rel (%p284) target = $region36
      $region35: #{self_attention_forward.1} parent=5 // pred_region
        // Predicated region
        $region37: #{self_attention_forward.1} parent=35 // pred_check
          %p287 = pneg %p38
        $region38: #{self_attention_forward.1} parent=35 // pred_check_branch
          %289 = sbr.rel (%p287) target = $region40
        $region39: #{self_attention_forward.1} parent=35 // pred_region
          %p290 = scmp.lt.s32.totalorder %s18, 1
          %s291 = scalar_select %p290, %s18, 1
          %s292 = smul.addr %s291, 8
          %s293 = smul.addr %s292, 4
          %s294 = scalar_lea.vmem %s0, %s293
        $region40: #{self_attention_forward.1} parent=35 // pred_fallthru
          _
        // Predicated region
        $region41: #{self_attention_forward.1} parent=35 // pred_check
          %p295 = pneg %p64
        $region42: #{self_attention_forward.1} parent=35 // pred_check_branch
          %297 = sbr.rel (%p295) target = $region44
        $region43: #{self_attention_forward.1} parent=35 // pred_region
          %p298 = scmp.lt.s32.totalorder %s18, 1
          %s299 = scalar_select %p298, %s18, 1
          %s300 = smul.addr %s299, 8
          %s301 = smul.addr %s300, 4
          %s302 = scalar_lea.vmem %s1, %s301
        $region44: #{self_attention_forward.1} parent=35 // pred_fallthru
          _
        // Predicated region
        $region45: #{self_attention_forward.1} parent=35 // pred_check
          %p303 = pneg %p90
        $region46: #{self_attention_forward.1} parent=35 // pred_check_branch
          %305 = sbr.rel (%p303) target = $region48
        $region47: #{self_attention_forward.1} parent=35 // pred_region
          %p306 = scmp.lt.s32.totalorder %s18, 1
          %s307 = scalar_select %p306, %s18, 1
          %s308 = smul.addr %s307, 8
          %s309 = smul.addr %s308, 4
          %s310 = scalar_lea.vmem %s2, %s309
        $region48: #{self_attention_forward.1} parent=35 // pred_fallthru
          _
        // Predicated region
        $region49: #{self_attention_forward.1} parent=35 // pred_check
          %p311 = pneg %p116
        $region50: #{self_attention_forward.1} parent=35 // pred_check_branch
          %313 = sbr.rel (%p311) target = $region52
        $region51: #{self_attention_forward.1} parent=35 // pred_region
          %p314 = scmp.lt.s32.totalorder %s18, 1
          %s315 = scalar_select %p314, %s18, 1
          %s316 = smul.addr %s315, 8
          %s317 = scalar_lea.vmem %s3, %s316
        $region52: #{self_attention_forward.1} parent=35 // pred_fallthru
          _
      $region36: #{self_attention_forward.1} parent=5 // pred_fallthru
        _
      %p318 = scmp.le.s32.totalorder 1, %s18
      %p319 = scmp.lt.s32.totalorder %s18, 3
      %p320 = pnand %p318, %p319
      %p321 = pneg %p320
      // Predicated region
      $region53: #{self_attention_forward.1} parent=5 // pred_check
        _
      $region54: #{self_attention_forward.1} parent=5 // pred_check_branch
        %323 = sbr.rel (%p320) target = $region56
      $region55: #{self_attention_forward.1} parent=5 // pred_region
        %s324 = ssub.s32 %s18, 1
        %p325 = scmp.lt.s32.totalorder %s23, 1
        %s326 = scalar_select %p325, %s23, 1
        %s327 = smul.addr %s326, 8
        %s328 = smul.addr %s327, 4
        %s329 = scalar_lea.vmem %s0, %s328
        %p330 = pneg %p44
        %p331 = pneg %p41
        %p332 = scmp.lt.s32.totalorder %s23, 1
        %s333 = scalar_select %p332, %s23, 1
        %s334 = smul.addr %s333, 8
        %s335 = smul.addr %s334, 4
        %s336 = scalar_lea.vmem %s1, %s335
        %p337 = pneg %p70
        %p338 = pneg %p67
        %p339 = scmp.lt.s32.totalorder %s23, 1
        %s340 = scalar_select %p339, %s23, 1
        %s341 = smul.addr %s340, 8
        %s342 = smul.addr %s341, 4
        %s343 = scalar_lea.vmem %s2, %s342
        %p344 = pneg %p96
        %p345 = pneg %p93
        %p346 = scmp.lt.s32.totalorder %s23, 1
        %s347 = scalar_select %p346, %s23, 1
        %s348 = smul.addr %s347, 8
        %s349 = scalar_lea.vmem %s3, %s348
        %p350 = pneg %p122
        %p351 = pneg %p119
        %p352 = pneg %p143
        %p353 = pneg %p140
        %p354 = pneg %p164
        %p355 = pneg %p161
        %p356 = pneg %p185
        %p357 = pneg %p182
        %p358 = pneg %p206
        %p359 = pneg %p203
        %p360 = pneg %p227
        %p361 = pneg %p224
        %p362 = pneg %p253
        %p363 = pneg %p250
        %s364 = sand.u32 %s240, 1
        %s365 = scalar_lea.sflag [#allocation3], %s364
        %s366 = sand.u32 %s240, 1
        %s367 = smul.addr %s366, 8
        %s368 = scalar_lea.vmem [#allocation2], %s367
        %p369 = scmp.lt.s32.totalorder %s23, 1
        %s370 = scalar_select %p369, %s23, 1
        %s371 = smul.addr %s370, 8
        %s372 = smul.addr %s371, 4
        %s373 = scalar_lea.vmem %s0, %s372
        %p374 = scmp.lt.s32.totalorder %s23, 1
        %s375 = scalar_select %p374, %s23, 1
        %s376 = smul.addr %s375, 8
        %s377 = smul.addr %s376, 4
        %s378 = scalar_lea.vmem %s1, %s377
        %p379 = scmp.lt.s32.totalorder %s23, 1
        %s380 = scalar_select %p379, %s23, 1
        %s381 = smul.addr %s380, 8
        %s382 = smul.addr %s381, 4
        %s383 = scalar_lea.vmem %s2, %s382
        %p384 = scmp.lt.s32.totalorder %s23, 1
        %s385 = scalar_select %p384, %s23, 1
        %s386 = smul.addr %s385, 8
        %s387 = scalar_lea.vmem %s3, %s386
        %v388 = vld [vmem:[%s373] sm:$0xf]
        %v389 = vld [vmem:[%s373 + $0x4] sm:$0xf]
        %v390 = vld [vmem:[%s373 + $0x8] sm:$0xf]
        %v391 = vld [vmem:[%s373 + $0xc] sm:$0xf]
        %v392 = vld [vmem:[%s373 + $0x10] sm:$0xf]
        %v393 = vld [vmem:[%s373 + $0x14] sm:$0xf]
        %v394 = vld [vmem:[%s373 + $0x18] sm:$0xf]
        %v395 = vld [vmem:[%s373 + $0x1c] sm:$0xf]
        %v396 = vld [vmem:[%s378] sm:$0xf]
        %v397 = vld [vmem:[%s378 + $0x4] sm:$0xf]
        %v398 = vld [vmem:[%s378 + $0x8] sm:$0xf]
        %v399 = vld [vmem:[%s378 + $0xc] sm:$0xf]
        %v400 = vld [vmem:[%s378 + $0x10] sm:$0xf]
        %v401 = vld [vmem:[%s378 + $0x14] sm:$0xf]
        %v402 = vld [vmem:[%s378 + $0x18] sm:$0xf]
        %v403 = vld [vmem:[%s378 + $0x1c] sm:$0xf]
        %v404 = vld [vmem:[%s383] sm:$0xf]
        %v405 = vld [vmem:[%s383 + $0x4] sm:$0xf]
        %v406 = vld [vmem:[%s383 + $0x8] sm:$0xf]
        %v407 = vld [vmem:[%s383 + $0xc] sm:$0xf]
        %v408 = vld [vmem:[%s383 + $0x10] sm:$0xf]
        %v409 = vld [vmem:[%s383 + $0x14] sm:$0xf]
        %v410 = vld [vmem:[%s383 + $0x18] sm:$0xf]
        %v411 = vld [vmem:[%s383 + $0x1c] sm:$0xf]
        %v412 = vld [vmem:[%s4] sm:$0xff]
        %v421 = vcombine.low %v388, %v389
        %v422 = vcombine.low %v390, %v391
        %v423 = vcombine.low %v392, %v393
        %v424 = vcombine.low %v394, %v395
        %vm425 = vcmask 64512
        %v426 = vsel %vm425, %v421, 0
        %v428 = vsel %vm425, %v422, 0
        %v430 = vsel %vm425, %v423, 0
        %v432 = vsel %vm425, %v424, 0
        %v435 = vsel %vm425, %v412, 0
        %437 = vmatprep.subr.mxu0 0.0
        %438 = vmatpush1.xpose.msra.mxu0 %v435
        %439 = vmatprep.subr.mxu0 0.0
        %440 = vmatpush1.xpose.msra.mxu0 0.0
        %441 = vmatprep.subr.mxu0 0.0
        %442 = vmatpush1.xpose.msra.mxu0 0.0
        %443 = vmatprep.subr.mxu0 0.0
        %444 = vmatpush1.xpose.msra.mxu0 0.0
        %445 = vmatprep.subr.mxu0 0.0
        %446 = vmatpush1.xpose.msra.mxu0 0.0
        %447 = vmatprep.subr.mxu0 0.0
        %448 = vmatpush1.xpose.msra.mxu0 0.0
        %449 = vmatprep.subr.mxu0 0.0
        %450 = vmatpush1.xpose.msra.mxu0 0.0
        %451 = vmatprep.subr.mxu0 0.0
        %452 = vmatpush1.xpose.msra.mxu0 0.0
        %453 = vmatprep.subr.mxu0 0.0
        %454 = vmatpush1.xpose.msra.mxu0 0.0
        %455 = vmatprep.subr.mxu0 0.0
        %456 = vmatpush1.xpose.msra.mxu0 0.0
        %457 = vmatprep.subr.mxu0 0.0
        %458 = vmatpush1.xpose.msra.mxu0 0.0
        %459 = vmatprep.subr.mxu0 0.0
        %460 = vmatpush1.xpose.msra.mxu0 0.0
        %461 = vmatprep.subr.mxu0 0.0
        %462 = vmatpush1.xpose.msra.mxu0 0.0
        %463 = vmatprep.subr.mxu0 0.0
        %464 = vmatpush1.xpose.msra.mxu0 0.0
        %465 = vmatprep.subr.mxu0 0.0
        %466 = vmatpush1.xpose.msra.mxu0 0.0
        %467 = vmatprep.subr.mxu0 0.0
        %468 = vmatpush1.xpose.msra.mxu0 0.0
        %469 = vmatprep.subr.mxu0 0.0
        %470 = vmatpush1.xpose.msra.mxu0 0.0
        %471 = vmatprep.subr.mxu0 0.0
        %472 = vmatpush1.xpose.msra.mxu0 0.0
        %473 = vmatprep.subr.mxu0 0.0
        %474 = vmatpush1.xpose.msra.mxu0 0.0
        %475 = vmatprep.subr.mxu0 0.0
        %476 = vmatpush1.xpose.msra.mxu0 0.0
        %477 = vmatprep.subr.mxu0 0.0
        %478 = vmatpush1.xpose.msra.mxu0 0.0
        %479 = vmatprep.subr.mxu0 0.0
        %480 = vmatpush1.xpose.msra.mxu0 0.0
        %481 = vmatprep.subr.mxu0 0.0
        %482 = vmatpush1.xpose.msra.mxu0 0.0
        %483 = vmatprep.subr.mxu0 0.0
        %484 = vmatpush1.xpose.msra.mxu0 0.0
        %485 = vmatprep.subr.mxu0 0.0
        %486 = vmatpush1.xpose.msra.mxu0 0.0
        %487 = vmatprep.subr.mxu0 0.0
        %488 = vmatpush1.xpose.msra.mxu0 0.0
        %489 = vmatprep.subr.mxu0 0.0
        %490 = vmatpush1.xpose.msra.mxu0 0.0
        %491 = vmatprep.subr.mxu0 0.0
        %492 = vmatpush1.xpose.msra.mxu0 0.0
        %493 = vmatprep.subr.mxu0 0.0
        %494 = vmatpush1.xpose.msra.mxu0 0.0
        %495 = vmatprep.subr.mxu0 0.0
        %496 = vmatpush1.xpose.msra.mxu0 0.0
        %497 = vmatprep.subr.mxu0 0.0
        %498 = vmatpush1.xpose.msra.mxu0 0.0
        %499 = vmatprep.subr.mxu0 0.0
        %500 = vmatpush1.xpose.msra.mxu0 0.0
        %501 = vmatprep.mubr.f32.mxu0 0.0
        %502 = vmatmul.mubr.f32.gmra.mrb[0].mxu0 %v426
        %v503 = vpop.f32.mrb[0].mxu0
        %v504 = vadd.f32 0.0, %v503
        %v505 = vpop.f32.mrb[0].mxu0
        %506 = vmatprep.mubr.f32.mxu0 0.0
        %507 = vmatmul.mubr.f32.gmra.mrb[0].mxu0 %v428
        %v508 = vpop.f32.mrb[0].mxu0
        %v509 = vadd.f32 0.0, %v508
        %v510 = vpop.f32.mrb[0].mxu0
        %511 = vmatprep.mubr.f32.mxu0 0.0
        %512 = vmatmul.mubr.f32.gmra.mrb[0].mxu0 %v430
        %v513 = vpop.f32.mrb[0].mxu0
        %v514 = vadd.f32 0.0, %v513
        %v515 = vpop.f32.mrb[0].mxu0
        %516 = vmatprep.mubr.f32.mxu0 0.0
        %517 = vmatmul.mubr.f32.gmra.mrb[0].mxu0 %v432
        %v518 = vpop.f32.mrb[0].mxu0
        %v519 = vadd.f32 0.0, %v518
        %v520 = vpop.f32.mrb[0].mxu0
        %521 = vdwg.mxu0
        %v526 = vcombine.high %v504, %v504
        %v527 = vcombine.high %v509, %v509
        %v528 = vcombine.high %v514, %v514
        %v529 = vcombine.high %v519, %v519
        %v534 = vld [vmem:[%s5] sm:$0xff]
        %v543 = vcombine.low %v396, %v397
        %v544 = vcombine.low %v398, %v399
        %v545 = vcombine.low %v400, %v401
        %v546 = vcombine.low %v402, %v403
        %v547 = vsel %vm425, %v543, 0
        %v549 = vsel %vm425, %v544, 0
        %v551 = vsel %vm425, %v545, 0
        %v553 = vsel %vm425, %v546, 0
        %v556 = vsel %vm425, %v534, 0
        %558 = vmatprep.subr.mxu0 0.0
        %559 = vmatpush1.xpose.msra.mxu0 %v556
        %560 = vmatprep.subr.mxu0 0.0
        %561 = vmatpush1.xpose.msra.mxu0 0.0
        %562 = vmatprep.subr.mxu0 0.0
        %563 = vmatpush1.xpose.msra.mxu0 0.0
        %564 = vmatprep.subr.mxu0 0.0
        %565 = vmatpush1.xpose.msra.mxu0 0.0
        %566 = vmatprep.subr.mxu0 0.0
        %567 = vmatpush1.xpose.msra.mxu0 0.0
        %568 = vmatprep.subr.mxu0 0.0
        %569 = vmatpush1.xpose.msra.mxu0 0.0
        %570 = vmatprep.subr.mxu0 0.0
        %571 = vmatpush1.xpose.msra.mxu0 0.0
        %572 = vmatprep.subr.mxu0 0.0
        %573 = vmatpush1.xpose.msra.mxu0 0.0
        %574 = vmatprep.subr.mxu0 0.0
        %575 = vmatpush1.xpose.msra.mxu0 0.0
        %576 = vmatprep.subr.mxu0 0.0
        %577 = vmatpush1.xpose.msra.mxu0 0.0
        %578 = vmatprep.subr.mxu0 0.0
        %579 = vmatpush1.xpose.msra.mxu0 0.0
        %580 = vmatprep.subr.mxu0 0.0
        %581 = vmatpush1.xpose.msra.mxu0 0.0
        %582 = vmatprep.subr.mxu0 0.0
        %583 = vmatpush1.xpose.msra.mxu0 0.0
        %584 = vmatprep.subr.mxu0 0.0
        %585 = vmatpush1.xpose.msra.mxu0 0.0
        %586 = vmatprep.subr.mxu0 0.0
        %587 = vmatpush1.xpose.msra.mxu0 0.0
        %588 = vmatprep.subr.mxu0 0.0
        %589 = vmatpush1.xpose.msra.mxu0 0.0
        %590 = vmatprep.subr.mxu0 0.0
        %591 = vmatpush1.xpose.msra.mxu0 0.0
        %592 = vmatprep.subr.mxu0 0.0
        %593 = vmatpush1.xpose.msra.mxu0 0.0
        %594 = vmatprep.subr.mxu0 0.0
        %595 = vmatpush1.xpose.msra.mxu0 0.0
        %596 = vmatprep.subr.mxu0 0.0
        %597 = vmatpush1.xpose.msra.mxu0 0.0
        %598 = vmatprep.subr.mxu0 0.0
        %599 = vmatpush1.xpose.msra.mxu0 0.0
        %600 = vmatprep.subr.mxu0 0.0
        %601 = vmatpush1.xpose.msra.mxu0 0.0
        %602 = vmatprep.subr.mxu0 0.0
        %603 = vmatpush1.xpose.msra.mxu0 0.0
        %604 = vmatprep.subr.mxu0 0.0
        %605 = vmatpush1.xpose.msra.mxu0 0.0
        %606 = vmatprep.subr.mxu0 0.0
        %607 = vmatpush1.xpose.msra.mxu0 0.0
        %608 = vmatprep.subr.mxu0 0.0
        %609 = vmatpush1.xpose.msra.mxu0 0.0
        %610 = vmatprep.subr.mxu0 0.0
        %611 = vmatpush1.xpose.msra.mxu0 0.0
        %612 = vmatprep.subr.mxu0 0.0
        %613 = vmatpush1.xpose.msra.mxu0 0.0
        %614 = vmatprep.subr.mxu0 0.0
        %615 = vmatpush1.xpose.msra.mxu0 0.0
        %616 = vmatprep.subr.mxu0 0.0
        %617 = vmatpush1.xpose.msra.mxu0 0.0
        %618 = vmatprep.subr.mxu0 0.0
        %619 = vmatpush1.xpose.msra.mxu0 0.0
        %620 = vmatprep.subr.mxu0 0.0
        %621 = vmatpush1.xpose.msra.mxu0 0.0
        %622 = vmatprep.mubr.f32.mxu0 0.0
        %623 = vmatmul.mubr.f32.gmra.mrb[0].mxu0 %v547
        %v624 = vpop.f32.mrb[0].mxu0
        %v625 = vadd.f32 0.0, %v624
        %v626 = vpop.f32.mrb[0].mxu0
        %627 = vmatprep.mubr.f32.mxu0 0.0
        %628 = vmatmul.mubr.f32.gmra.mrb[0].mxu0 %v549
        %v629 = vpop.f32.mrb[0].mxu0
        %v630 = vadd.f32 0.0, %v629
        %v631 = vpop.f32.mrb[0].mxu0
        %632 = vmatprep.mubr.f32.mxu0 0.0
        %633 = vmatmul.mubr.f32.gmra.mrb[0].mxu0 %v551
        %v634 = vpop.f32.mrb[0].mxu0
        %v635 = vadd.f32 0.0, %v634
        %v636 = vpop.f32.mrb[0].mxu0
        %637 = vmatprep.mubr.f32.mxu0 0.0
        %638 = vmatmul.mubr.f32.gmra.mrb[0].mxu0 %v553
        %v639 = vpop.f32.mrb[0].mxu0
        %v640 = vadd.f32 0.0, %v639
        %v641 = vpop.f32.mrb[0].mxu0
        %642 = vdwg.mxu0
        %v647 = vcombine.high %v625, %v625
        %v648 = vcombine.high %v630, %v630
        %v649 = vcombine.high %v635, %v635
        %v650 = vcombine.high %v640, %v640
        %v655 = vld [vmem:[%s6] sm:$0xff]
        %v664 = vcombine.low %v404, %v405
        %v665 = vcombine.low %v406, %v407
        %v666 = vcombine.low %v408, %v409
        %v667 = vcombine.low %v410, %v411
        %v668 = vsel %vm425, %v664, 0
        %v670 = vsel %vm425, %v665, 0
        %v672 = vsel %vm425, %v666, 0
        %v674 = vsel %vm425, %v667, 0
        %v677 = vsel %vm425, %v655, 0
        %679 = vmatprep.subr.mxu0 0.0
        %680 = vmatpush1.xpose.msra.mxu0 %v677
        %681 = vmatprep.subr.mxu0 0.0
        %682 = vmatpush1.xpose.msra.mxu0 0.0
        %683 = vmatprep.subr.mxu0 0.0
        %684 = vmatpush1.xpose.msra.mxu0 0.0
        %685 = vmatprep.subr.mxu0 0.0
        %686 = vmatpush1.xpose.msra.mxu0 0.0
        %687 = vmatprep.subr.mxu0 0.0
        %688 = vmatpush1.xpose.msra.mxu0 0.0
        %689 = vmatprep.subr.mxu0 0.0
        %690 = vmatpush1.xpose.msra.mxu0 0.0
        %691 = vmatprep.subr.mxu0 0.0
        %692 = vmatpush1.xpose.msra.mxu0 0.0
        %693 = vmatprep.subr.mxu0 0.0
        %694 = vmatpush1.xpose.msra.mxu0 0.0
        %695 = vmatprep.subr.mxu0 0.0
        %696 = vmatpush1.xpose.msra.mxu0 0.0
        %697 = vmatprep.subr.mxu0 0.0
        %698 = vmatpush1.xpose.msra.mxu0 0.0
        %699 = vmatprep.subr.mxu0 0.0
        %700 = vmatpush1.xpose.msra.mxu0 0.0
        %701 = vmatprep.subr.mxu0 0.0
        %702 = vmatpush1.xpose.msra.mxu0 0.0
        %703 = vmatprep.subr.mxu0 0.0
        %704 = vmatpush1.xpose.msra.mxu0 0.0
        %705 = vmatprep.subr.mxu0 0.0
        %706 = vmatpush1.xpose.msra.mxu0 0.0
        %707 = vmatprep.subr.mxu0 0.0
        %708 = vmatpush1.xpose.msra.mxu0 0.0
        %709 = vmatprep.subr.mxu0 0.0
        %710 = vmatpush1.xpose.msra.mxu0 0.0
        %711 = vmatprep.subr.mxu0 0.0
        %712 = vmatpush1.xpose.msra.mxu0 0.0
        %713 = vmatprep.subr.mxu0 0.0
        %714 = vmatpush1.xpose.msra.mxu0 0.0
        %715 = vmatprep.subr.mxu0 0.0
        %716 = vmatpush1.xpose.msra.mxu0 0.0
        %717 = vmatprep.subr.mxu0 0.0
        %718 = vmatpush1.xpose.msra.mxu0 0.0
        %719 = vmatprep.subr.mxu0 0.0
        %720 = vmatpush1.xpose.msra.mxu0 0.0
        %721 = vmatprep.subr.mxu0 0.0
        %722 = vmatpush1.xpose.msra.mxu0 0.0
        %723 = vmatprep.subr.mxu0 0.0
        %724 = vmatpush1.xpose.msra.mxu0 0.0
        %725 = vmatprep.subr.mxu0 0.0
        %726 = vmatpush1.xpose.msra.mxu0 0.0
        %727 = vmatprep.subr.mxu0 0.0
        %728 = vmatpush1.xpose.msra.mxu0 0.0
        %729 = vmatprep.subr.mxu0 0.0
        %730 = vmatpush1.xpose.msra.mxu0 0.0
        %731 = vmatprep.subr.mxu0 0.0
        %732 = vmatpush1.xpose.msra.mxu0 0.0
        %733 = vmatprep.subr.mxu0 0.0
        %734 = vmatpush1.xpose.msra.mxu0 0.0
        %735 = vmatprep.subr.mxu0 0.0
        %736 = vmatpush1.xpose.msra.mxu0 0.0
        %737 = vmatprep.subr.mxu0 0.0
        %738 = vmatpush1.xpose.msra.mxu0 0.0
        %739 = vmatprep.subr.mxu0 0.0
        %740 = vmatpush1.xpose.msra.mxu0 0.0
        %741 = vmatprep.subr.mxu0 0.0
        %742 = vmatpush1.xpose.msra.mxu0 0.0
        %743 = vmatprep.mubr.f32.mxu0 0.0
        %744 = vmatmul.mubr.f32.gmra.mrb[0].mxu0 %v668
        %v745 = vpop.f32.mrb[0].mxu0
        %v746 = vadd.f32 0.0, %v745
        %v747 = vpop.f32.mrb[0].mxu0
        %748 = vmatprep.mubr.f32.mxu0 0.0
        %749 = vmatmul.mubr.f32.gmra.mrb[0].mxu0 %v670
        %v750 = vpop.f32.mrb[0].mxu0
        %v751 = vadd.f32 0.0, %v750
        %v752 = vpop.f32.mrb[0].mxu0
        %753 = vmatprep.mubr.f32.mxu0 0.0
        %754 = vmatmul.mubr.f32.gmra.mrb[0].mxu0 %v672
        %v755 = vpop.f32.mrb[0].mxu0
        %v756 = vadd.f32 0.0, %v755
        %v757 = vpop.f32.mrb[0].mxu0
        %758 = vmatprep.mubr.f32.mxu0 0.0
        %759 = vmatmul.mubr.f32.gmra.mrb[0].mxu0 %v674
        %v760 = vpop.f32.mrb[0].mxu0
        %v761 = vadd.f32 0.0, %v760
        %v762 = vpop.f32.mrb[0].mxu0
        %763 = vdwg.mxu0
        %v768 = vcombine.high %v746, %v746
        %v769 = vcombine.high %v751, %v751
        %v770 = vcombine.high %v756, %v756
        %v771 = vcombine.high %v761, %v761
        %v776 = vcombine.low %v504, %v509
        %v778 = vunpack.c.l.s4 1983009808
        %v779 = vunpack.c.0.s8 %v778
        %v780 = vlaneseq
        %v781 = vshrl.u32 %v780, 7
        %v782 = vsub.s32 %v779, %v781
        %v783 = vrot.slane %v776, %v782
        %v784 = vcombine.low %v526, %v527
        %v786 = vunpack.c.l.s4 1983009808
        %v787 = vunpack.c.0.s8 %v786
        %v788 = vlaneseq
        %v789 = vshrl.u32 %v788, 7
        %v790 = vsub.s32 %v787, %v789
        %v791 = vrot.slane %v784, %v790
        %v792 = vcombine.low %v783, %v791
        %v793 = vcombine.high %v783, %v791
        %v795 = vunpack.c.l.s4 1934713408
        %v796 = vunpack.c.0.s8 %v795
        %v797 = vlaneseq
        %v798 = vshrl.u32 %v797, 7
        %v799 = vsub.s32 %v796, %v798
        %v800 = vrot.slane %v792, %v799
        %v802 = vunpack.c.l.s4 1934713408
        %v803 = vunpack.c.0.s8 %v802
        %v804 = vlaneseq
        %v805 = vshrl.u32 %v804, 7
        %v806 = vsub.s32 %v803, %v805
        %v807 = vrot.slane %v793, %v806
        %v808 = vcombine.high %v800, 0.0
        %v809 = vcombine.high %v807, 0.0
        %v810 = vcombine.low %v514, %v519
        %v812 = vunpack.c.l.s4 1983009808
        %v813 = vunpack.c.0.s8 %v812
        %v814 = vlaneseq
        %v815 = vshrl.u32 %v814, 7
        %v816 = vsub.s32 %v813, %v815
        %v817 = vrot.slane %v810, %v816
        %v818 = vcombine.low %v528, %v529
        %v820 = vunpack.c.l.s4 1983009808
        %v821 = vunpack.c.0.s8 %v820
        %v822 = vlaneseq
        %v823 = vshrl.u32 %v822, 7
        %v824 = vsub.s32 %v821, %v823
        %v825 = vrot.slane %v818, %v824
        %v826 = vcombine.low %v817, %v825
        %v827 = vcombine.high %v817, %v825
        %v829 = vunpack.c.l.s4 1934713408
        %v830 = vunpack.c.0.s8 %v829
        %v831 = vlaneseq
        %v832 = vshrl.u32 %v831, 7
        %v833 = vsub.s32 %v830, %v832
        %v834 = vrot.slane %v826, %v833
        %v836 = vunpack.c.l.s4 1934713408
        %v837 = vunpack.c.0.s8 %v836
        %v838 = vlaneseq
        %v839 = vshrl.u32 %v838, 7
        %v840 = vsub.s32 %v837, %v839
        %v841 = vrot.slane %v827, %v840
        %v842 = vcombine.high %v834, 0.0
        %v843 = vcombine.high %v841, 0.0
        %v844 = vcombine.low %v625, %v630
        %v846 = vunpack.c.l.s4 1983009808
        %v847 = vunpack.c.0.s8 %v846
        %v848 = vlaneseq
        %v849 = vshrl.u32 %v848, 7
        %v850 = vsub.s32 %v847, %v849
        %v851 = vrot.slane %v844, %v850
        %v852 = vcombine.low %v647, %v648
        %v854 = vunpack.c.l.s4 1983009808
        %v855 = vunpack.c.0.s8 %v854
        %v856 = vlaneseq
        %v857 = vshrl.u32 %v856, 7
        %v858 = vsub.s32 %v855, %v857
        %v859 = vrot.slane %v852, %v858
        %v860 = vcombine.low %v851, %v859
        %v861 = vcombine.high %v851, %v859
        %v863 = vunpack.c.l.s4 1934713408
        %v864 = vunpack.c.0.s8 %v863
        %v865 = vlaneseq
        %v866 = vshrl.u32 %v865, 7
        %v867 = vsub.s32 %v864, %v866
        %v868 = vrot.slane %v860, %v867
        %v870 = vunpack.c.l.s4 1934713408
        %v871 = vunpack.c.0.s8 %v870
        %v872 = vlaneseq
        %v873 = vshrl.u32 %v872, 7
        %v874 = vsub.s32 %v871, %v873
        %v875 = vrot.slane %v861, %v874
        %v876 = vcombine.high %v868, 0.0
        %v877 = vcombine.high %v875, 0.0
        %v878 = vcombine.low %v635, %v640
        %v880 = vunpack.c.l.s4 1983009808
        %v881 = vunpack.c.0.s8 %v880
        %v882 = vlaneseq
        %v883 = vshrl.u32 %v882, 7
        %v884 = vsub.s32 %v881, %v883
        %v885 = vrot.slane %v878, %v884
        %v886 = vcombine.low %v649, %v650
        %v888 = vunpack.c.l.s4 1983009808
        %v889 = vunpack.c.0.s8 %v888
        %v890 = vlaneseq
        %v891 = vshrl.u32 %v890, 7
        %v892 = vsub.s32 %v889, %v891
        %v893 = vrot.slane %v886, %v892
        %v894 = vcombine.low %v885, %v893
        %v895 = vcombine.high %v885, %v893
        %v897 = vunpack.c.l.s4 1934713408
        %v898 = vunpack.c.0.s8 %v897
        %v899 = vlaneseq
        %v900 = vshrl.u32 %v899, 7
        %v901 = vsub.s32 %v898, %v900
        %v902 = vrot.slane %v894, %v901
        %v904 = vunpack.c.l.s4 1934713408
        %v905 = vunpack.c.0.s8 %v904
        %v906 = vlaneseq
        %v907 = vshrl.u32 %v906, 7
        %v908 = vsub.s32 %v905, %v907
        %v909 = vrot.slane %v895, %v908
        %v910 = vcombine.high %v902, 0.0
        %v911 = vcombine.high %v909, 0.0
        %v912 = vcombine.low %v746, %v751
        %v914 = vunpack.c.l.s4 1983009808
        %v915 = vunpack.c.0.s8 %v914
        %v916 = vlaneseq
        %v917 = vshrl.u32 %v916, 7
        %v918 = vsub.s32 %v915, %v917
        %v919 = vrot.slane %v912, %v918
        %v920 = vcombine.low %v768, %v769
        %v922 = vunpack.c.l.s4 1983009808
        %v923 = vunpack.c.0.s8 %v922
        %v924 = vlaneseq
        %v925 = vshrl.u32 %v924, 7
        %v926 = vsub.s32 %v923, %v925
        %v927 = vrot.slane %v920, %v926
        %v928 = vcombine.low %v919, %v927
        %v929 = vcombine.high %v919, %v927
        %v931 = vunpack.c.l.s4 1934713408
        %v932 = vunpack.c.0.s8 %v931
        %v933 = vlaneseq
        %v934 = vshrl.u32 %v933, 7
        %v935 = vsub.s32 %v932, %v934
        %v936 = vrot.slane %v928, %v935
        %v938 = vunpack.c.l.s4 1934713408
        %v939 = vunpack.c.0.s8 %v938
        %v940 = vlaneseq
        %v941 = vshrl.u32 %v940, 7
        %v942 = vsub.s32 %v939, %v941
        %v943 = vrot.slane %v929, %v942
        %v944 = vcombine.high %v936, 0.0
        %v945 = vcombine.high %v943, 0.0
        %v946 = vcombine.low %v756, %v761
        %v948 = vunpack.c.l.s4 1983009808
        %v949 = vunpack.c.0.s8 %v948
        %v950 = vlaneseq
        %v951 = vshrl.u32 %v950, 7
        %v952 = vsub.s32 %v949, %v951
        %v953 = vrot.slane %v946, %v952
        %v954 = vcombine.low %v770, %v771
        %v956 = vunpack.c.l.s4 1983009808
        %v957 = vunpack.c.0.s8 %v956
        %v958 = vlaneseq
        %v959 = vshrl.u32 %v958, 7
        %v960 = vsub.s32 %v957, %v959
        %v961 = vrot.slane %v954, %v960
        %v962 = vcombine.low %v953, %v961
        %v963 = vcombine.high %v953, %v961
        %v965 = vunpack.c.l.s4 1934713408
        %v966 = vunpack.c.0.s8 %v965
        %v967 = vlaneseq
        %v968 = vshrl.u32 %v967, 7
        %v969 = vsub.s32 %v966, %v968
        %v970 = vrot.slane %v962, %v969
        %v972 = vunpack.c.l.s4 1934713408
        %v973 = vunpack.c.0.s8 %v972
        %v974 = vlaneseq
        %v975 = vshrl.u32 %v974, 7
        %v976 = vsub.s32 %v973, %v975
        %v977 = vrot.slane %v963, %v976
        %v978 = vcombine.high %v970, 0.0
        %v979 = vcombine.high %v977, 0.0
        %v982 = vcombine.low %v800, %v834
        %v985 = vcombine.low %v868, %v902
        %v986 = vsel %vm425, %v982, 0
        %v988 = vsel %vm425, %v985, 0
        %990 = vmatprep.subr.mxu0 0.0
        %991 = vmatpush1.xpose.msra.mxu0 %v988
        %992 = vmatprep.subr.mxu0 0.0
        %993 = vmatpush1.xpose.msra.mxu0 0.0
        %994 = vmatprep.subr.mxu0 0.0
        %995 = vmatpush1.xpose.msra.mxu0 0.0
        %996 = vmatprep.subr.mxu0 0.0
        %997 = vmatpush1.xpose.msra.mxu0 0.0
        %998 = vmatprep.subr.mxu0 0.0
        %999 = vmatpush1.xpose.msra.mxu0 0.0
        %1000 = vmatprep.subr.mxu0 0.0
        %1001 = vmatpush1.xpose.msra.mxu0 0.0
        %1002 = vmatprep.subr.mxu0 0.0
        %1003 = vmatpush1.xpose.msra.mxu0 0.0
        %1004 = vmatprep.subr.mxu0 0.0
        %1005 = vmatpush1.xpose.msra.mxu0 0.0
        %1006 = vmatprep.subr.mxu0 0.0
        %1007 = vmatpush1.xpose.msra.mxu0 0.0
        %1008 = vmatprep.subr.mxu0 0.0
        %1009 = vmatpush1.xpose.msra.mxu0 0.0
        %1010 = vmatprep.subr.mxu0 0.0
        %1011 = vmatpush1.xpose.msra.mxu0 0.0
        %1012 = vmatprep.subr.mxu0 0.0
        %1013 = vmatpush1.xpose.msra.mxu0 0.0
        %1014 = vmatprep.subr.mxu0 0.0
        %1015 = vmatpush1.xpose.msra.mxu0 0.0
        %1016 = vmatprep.subr.mxu0 0.0
        %1017 = vmatpush1.xpose.msra.mxu0 0.0
        %1018 = vmatprep.subr.mxu0 0.0
        %1019 = vmatpush1.xpose.msra.mxu0 0.0
        %1020 = vmatprep.subr.mxu0 0.0
        %1021 = vmatpush1.xpose.msra.mxu0 0.0
        %1022 = vmatprep.subr.mxu0 0.0
        %1023 = vmatpush1.xpose.msra.mxu0 0.0
        %1024 = vmatprep.subr.mxu0 0.0
        %1025 = vmatpush1.xpose.msra.mxu0 0.0
        %1026 = vmatprep.subr.mxu0 0.0
        %1027 = vmatpush1.xpose.msra.mxu0 0.0
        %1028 = vmatprep.subr.mxu0 0.0
        %1029 = vmatpush1.xpose.msra.mxu0 0.0
        %1030 = vmatprep.subr.mxu0 0.0
        %1031 = vmatpush1.xpose.msra.mxu0 0.0
        %1032 = vmatprep.subr.mxu0 0.0
        %1033 = vmatpush1.xpose.msra.mxu0 0.0
        %1034 = vmatprep.subr.mxu0 0.0
        %1035 = vmatpush1.xpose.msra.mxu0 0.0
        %1036 = vmatprep.subr.mxu0 0.0
        %1037 = vmatpush1.xpose.msra.mxu0 0.0
        %1038 = vmatprep.subr.mxu0 0.0
        %1039 = vmatpush1.xpose.msra.mxu0 0.0
        %1040 = vmatprep.subr.mxu0 0.0
        %1041 = vmatpush1.xpose.msra.mxu0 0.0
        %1042 = vmatprep.subr.mxu0 0.0
        %1043 = vmatpush1.xpose.msra.mxu0 0.0
        %1044 = vmatprep.subr.mxu0 0.0
        %1045 = vmatpush1.xpose.msra.mxu0 0.0
        %1046 = vmatprep.subr.mxu0 0.0
        %1047 = vmatpush1.xpose.msra.mxu0 0.0
        %1048 = vmatprep.subr.mxu0 0.0
        %1049 = vmatpush1.xpose.msra.mxu0 0.0
        %1050 = vmatprep.subr.mxu0 0.0
        %1051 = vmatpush1.xpose.msra.mxu0 0.0
        %1052 = vmatprep.subr.mxu0 0.0
        %1053 = vmatpush1.xpose.msra.mxu0 0.0
        %1054 = vmatprep.mubr.f32.mxu0 0.0
        %1055 = vmatmul.mubr.f32.gmra.mrb[0].mxu0 %v986
        %v1056 = vpop.f32.mrb[0].mxu0
        %v1057 = vadd.f32 0.0, %v1056
        %v1058 = vpop.f32.mrb[0].mxu0
        %1059 = vdwg.mxu0
        %v1062 = vcombine.low %v808, %v842
        %v1065 = vcombine.low %v876, %v910
        %v1066 = vsel %vm425, %v1062, 0
        %v1068 = vsel %vm425, %v1065, 0
        %1070 = vmatprep.subr.mxu0 0.0
        %1071 = vmatpush1.xpose.msra.mxu0 %v1068
        %1072 = vmatprep.subr.mxu0 0.0
        %1073 = vmatpush1.xpose.msra.mxu0 0.0
        %1074 = vmatprep.subr.mxu0 0.0
        %1075 = vmatpush1.xpose.msra.mxu0 0.0
        %1076 = vmatprep.subr.mxu0 0.0
        %1077 = vmatpush1.xpose.msra.mxu0 0.0
        %1078 = vmatprep.subr.mxu0 0.0
        %1079 = vmatpush1.xpose.msra.mxu0 0.0
        %1080 = vmatprep.subr.mxu0 0.0
        %1081 = vmatpush1.xpose.msra.mxu0 0.0
        %1082 = vmatprep.subr.mxu0 0.0
        %1083 = vmatpush1.xpose.msra.mxu0 0.0
        %1084 = vmatprep.subr.mxu0 0.0
        %1085 = vmatpush1.xpose.msra.mxu0 0.0
        %1086 = vmatprep.subr.mxu0 0.0
        %1087 = vmatpush1.xpose.msra.mxu0 0.0
        %1088 = vmatprep.subr.mxu0 0.0
        %1089 = vmatpush1.xpose.msra.mxu0 0.0
        %1090 = vmatprep.subr.mxu0 0.0
        %1091 = vmatpush1.xpose.msra.mxu0 0.0
        %1092 = vmatprep.subr.mxu0 0.0
        %1093 = vmatpush1.xpose.msra.mxu0 0.0
        %1094 = vmatprep.subr.mxu0 0.0
        %1095 = vmatpush1.xpose.msra.mxu0 0.0
        %1096 = vmatprep.subr.mxu0 0.0
        %1097 = vmatpush1.xpose.msra.mxu0 0.0
        %1098 = vmatprep.subr.mxu0 0.0
        %1099 = vmatpush1.xpose.msra.mxu0 0.0
        %1100 = vmatprep.subr.mxu0 0.0
        %1101 = vmatpush1.xpose.msra.mxu0 0.0
        %1102 = vmatprep.subr.mxu0 0.0
        %1103 = vmatpush1.xpose.msra.mxu0 0.0
        %1104 = vmatprep.subr.mxu0 0.0
        %1105 = vmatpush1.xpose.msra.mxu0 0.0
        %1106 = vmatprep.subr.mxu0 0.0
        %1107 = vmatpush1.xpose.msra.mxu0 0.0
        %1108 = vmatprep.subr.mxu0 0.0
        %1109 = vmatpush1.xpose.msra.mxu0 0.0
        %1110 = vmatprep.subr.mxu0 0.0
        %1111 = vmatpush1.xpose.msra.mxu0 0.0
        %1112 = vmatprep.subr.mxu0 0.0
        %1113 = vmatpush1.xpose.msra.mxu0 0.0
        %1114 = vmatprep.subr.mxu0 0.0
        %1115 = vmatpush1.xpose.msra.mxu0 0.0
        %1116 = vmatprep.subr.mxu0 0.0
        %1117 = vmatpush1.xpose.msra.mxu0 0.0
        %1118 = vmatprep.subr.mxu0 0.0
        %1119 = vmatpush1.xpose.msra.mxu0 0.0
        %1120 = vmatprep.subr.mxu0 0.0
        %1121 = vmatpush1.xpose.msra.mxu0 0.0
        %1122 = vmatprep.subr.mxu0 0.0
        %1123 = vmatpush1.xpose.msra.mxu0 0.0
        %1124 = vmatprep.subr.mxu0 0.0
        %1125 = vmatpush1.xpose.msra.mxu0 0.0
        %1126 = vmatprep.subr.mxu0 0.0
        %1127 = vmatpush1.xpose.msra.mxu0 0.0
        %1128 = vmatprep.subr.mxu0 0.0
        %1129 = vmatpush1.xpose.msra.mxu0 0.0
        %1130 = vmatprep.subr.mxu0 0.0
        %1131 = vmatpush1.xpose.msra.mxu0 0.0
        %1132 = vmatprep.subr.mxu0 0.0
        %1133 = vmatpush1.xpose.msra.mxu0 0.0
        %1134 = vmatprep.mubr.f32.mxu0 0.0
        %1135 = vmatmul.mubr.f32.gmra.mrb[0].mxu0 %v1066
        %v1136 = vpop.f32.mrb[0].mxu0
        %v1137 = vadd.f32 0.0, %v1136
        %v1138 = vpop.f32.mrb[0].mxu0
        %1139 = vdwg.mxu0
        %v1142 = vcombine.low %v807, %v841
        %v1145 = vcombine.low %v875, %v909
        %v1146 = vsel %vm425, %v1142, 0
        %v1148 = vsel %vm425, %v1145, 0
        %1150 = vmatprep.subr.mxu0 0.0
        %1151 = vmatpush1.xpose.msra.mxu0 %v1148
        %1152 = vmatprep.subr.mxu0 0.0
        %1153 = vmatpush1.xpose.msra.mxu0 0.0
        %1154 = vmatprep.subr.mxu0 0.0
        %1155 = vmatpush1.xpose.msra.mxu0 0.0
        %1156 = vmatprep.subr.mxu0 0.0
        %1157 = vmatpush1.xpose.msra.mxu0 0.0
        %1158 = vmatprep.subr.mxu0 0.0
        %1159 = vmatpush1.xpose.msra.mxu0 0.0
        %1160 = vmatprep.subr.mxu0 0.0
        %1161 = vmatpush1.xpose.msra.mxu0 0.0
        %1162 = vmatprep.subr.mxu0 0.0
        %1163 = vmatpush1.xpose.msra.mxu0 0.0
        %1164 = vmatprep.subr.mxu0 0.0
        %1165 = vmatpush1.xpose.msra.mxu0 0.0
        %1166 = vmatprep.subr.mxu0 0.0
        %1167 = vmatpush1.xpose.msra.mxu0 0.0
        %1168 = vmatprep.subr.mxu0 0.0
        %1169 = vmatpush1.xpose.msra.mxu0 0.0
        %1170 = vmatprep.subr.mxu0 0.0
        %1171 = vmatpush1.xpose.msra.mxu0 0.0
        %1172 = vmatprep.subr.mxu0 0.0
        %1173 = vmatpush1.xpose.msra.mxu0 0.0
        %1174 = vmatprep.subr.mxu0 0.0
        %1175 = vmatpush1.xpose.msra.mxu0 0.0
        %1176 = vmatprep.subr.mxu0 0.0
        %1177 = vmatpush1.xpose.msra.mxu0 0.0
        %1178 = vmatprep.subr.mxu0 0.0
        %1179 = vmatpush1.xpose.msra.mxu0 0.0
        %1180 = vmatprep.subr.mxu0 0.0
        %1181 = vmatpush1.xpose.msra.mxu0 0.0
        %1182 = vmatprep.subr.mxu0 0.0
        %1183 = vmatpush1.xpose.msra.mxu0 0.0
        %1184 = vmatprep.subr.mxu0 0.0
        %1185 = vmatpush1.xpose.msra.mxu0 0.0
        %1186 = vmatprep.subr.mxu0 0.0
        %1187 = vmatpush1.xpose.msra.mxu0 0.0
        %1188 = vmatprep.subr.mxu0 0.0
        %1189 = vmatpush1.xpose.msra.mxu0 0.0
        %1190 = vmatprep.subr.mxu0 0.0
        %1191 = vmatpush1.xpose.msra.mxu0 0.0
        %1192 = vmatprep.subr.mxu0 0.0
        %1193 = vmatpush1.xpose.msra.mxu0 0.0
        %1194 = vmatprep.subr.mxu0 0.0
        %1195 = vmatpush1.xpose.msra.mxu0 0.0
        %1196 = vmatprep.subr.mxu0 0.0
        %1197 = vmatpush1.xpose.msra.mxu0 0.0
        %1198 = vmatprep.subr.mxu0 0.0
        %1199 = vmatpush1.xpose.msra.mxu0 0.0
        %1200 = vmatprep.subr.mxu0 0.0
        %1201 = vmatpush1.xpose.msra.mxu0 0.0
        %1202 = vmatprep.subr.mxu0 0.0
        %1203 = vmatpush1.xpose.msra.mxu0 0.0
        %1204 = vmatprep.subr.mxu0 0.0
        %1205 = vmatpush1.xpose.msra.mxu0 0.0
        %1206 = vmatprep.subr.mxu0 0.0
        %1207 = vmatpush1.xpose.msra.mxu0 0.0
        %1208 = vmatprep.subr.mxu0 0.0
        %1209 = vmatpush1.xpose.msra.mxu0 0.0
        %1210 = vmatprep.subr.mxu0 0.0
        %1211 = vmatpush1.xpose.msra.mxu0 0.0
        %1212 = vmatprep.subr.mxu0 0.0
        %1213 = vmatpush1.xpose.msra.mxu0 0.0
        %1214 = vmatprep.mubr.f32.mxu0 0.0
        %1215 = vmatmul.mubr.f32.gmra.mrb[0].mxu0 %v1146
        %v1216 = vpop.f32.mrb[0].mxu0
        %v1217 = vadd.f32 0.0, %v1216
        %v1218 = vpop.f32.mrb[0].mxu0
        %1219 = vdwg.mxu0
        %v1222 = vcombine.low %v809, %v843
        %v1225 = vcombine.low %v877, %v911
        %v1226 = vsel %vm425, %v1222, 0
        %v1228 = vsel %vm425, %v1225, 0
        %1230 = vmatprep.subr.mxu0 0.0
        %1231 = vmatpush1.xpose.msra.mxu0 %v1228
        %1232 = vmatprep.subr.mxu0 0.0
        %1233 = vmatpush1.xpose.msra.mxu0 0.0
        %1234 = vmatprep.subr.mxu0 0.0
        %1235 = vmatpush1.xpose.msra.mxu0 0.0
        %1236 = vmatprep.subr.mxu0 0.0
        %1237 = vmatpush1.xpose.msra.mxu0 0.0
        %1238 = vmatprep.subr.mxu0 0.0
        %1239 = vmatpush1.xpose.msra.mxu0 0.0
        %1240 = vmatprep.subr.mxu0 0.0
        %1241 = vmatpush1.xpose.msra.mxu0 0.0
        %1242 = vmatprep.subr.mxu0 0.0
        %1243 = vmatpush1.xpose.msra.mxu0 0.0
        %1244 = vmatprep.subr.mxu0 0.0
        %1245 = vmatpush1.xpose.msra.mxu0 0.0
        %1246 = vmatprep.subr.mxu0 0.0
        %1247 = vmatpush1.xpose.msra.mxu0 0.0
        %1248 = vmatprep.subr.mxu0 0.0
        %1249 = vmatpush1.xpose.msra.mxu0 0.0
        %1250 = vmatprep.subr.mxu0 0.0
        %1251 = vmatpush1.xpose.msra.mxu0 0.0
        %1252 = vmatprep.subr.mxu0 0.0
        %1253 = vmatpush1.xpose.msra.mxu0 0.0
        %1254 = vmatprep.subr.mxu0 0.0
        %1255 = vmatpush1.xpose.msra.mxu0 0.0
        %1256 = vmatprep.subr.mxu0 0.0
        %1257 = vmatpush1.xpose.msra.mxu0 0.0
        %1258 = vmatprep.subr.mxu0 0.0
        %1259 = vmatpush1.xpose.msra.mxu0 0.0
        %1260 = vmatprep.subr.mxu0 0.0
        %1261 = vmatpush1.xpose.msra.mxu0 0.0
        %1262 = vmatprep.subr.mxu0 0.0
        %1263 = vmatpush1.xpose.msra.mxu0 0.0
        %1264 = vmatprep.subr.mxu0 0.0
        %1265 = vmatpush1.xpose.msra.mxu0 0.0
        %1266 = vmatprep.subr.mxu0 0.0
        %1267 = vmatpush1.xpose.msra.mxu0 0.0
        %1268 = vmatprep.subr.mxu0 0.0
        %1269 = vmatpush1.xpose.msra.mxu0 0.0
        %1270 = vmatprep.subr.mxu0 0.0
        %1271 = vmatpush1.xpose.msra.mxu0 0.0
        %1272 = vmatprep.subr.mxu0 0.0
        %1273 = vmatpush1.xpose.msra.mxu0 0.0
        %1274 = vmatprep.subr.mxu0 0.0
        %1275 = vmatpush1.xpose.msra.mxu0 0.0
        %1276 = vmatprep.subr.mxu0 0.0
        %1277 = vmatpush1.xpose.msra.mxu0 0.0
        %1278 = vmatprep.subr.mxu0 0.0
        %1279 = vmatpush1.xpose.msra.mxu0 0.0
        %1280 = vmatprep.subr.mxu0 0.0
        %1281 = vmatpush1.xpose.msra.mxu0 0.0
        %1282 = vmatprep.subr.mxu0 0.0
        %1283 = vmatpush1.xpose.msra.mxu0 0.0
        %1284 = vmatprep.subr.mxu0 0.0
        %1285 = vmatpush1.xpose.msra.mxu0 0.0
        %1286 = vmatprep.subr.mxu0 0.0
        %1287 = vmatpush1.xpose.msra.mxu0 0.0
        %1288 = vmatprep.subr.mxu0 0.0
        %1289 = vmatpush1.xpose.msra.mxu0 0.0
        %1290 = vmatprep.subr.mxu0 0.0
        %1291 = vmatpush1.xpose.msra.mxu0 0.0
        %1292 = vmatprep.subr.mxu0 0.0
        %1293 = vmatpush1.xpose.msra.mxu0 0.0
        %1294 = vmatprep.mubr.f32.mxu0 0.0
        %1295 = vmatmul.mubr.f32.gmra.mrb[0].mxu0 %v1226
        %v1296 = vpop.f32.mrb[0].mxu0
        %v1297 = vadd.f32 0.0, %v1296
        %v1298 = vpop.f32.mrb[0].mxu0
        %1299 = vdwg.mxu0
        %v1300 = vmul.f32 %v1057, 0.35355338
        %v1301 = vmul.f32 %v1137, 0.35355338
        %v1302 = vmul.f32 %v1217, 0.35355338
        %v1303 = vmul.f32 %v1297, 0.35355338
        %v1304 = vld [vmem:[%s387] sm:$0xff]
        %vm1305 = vcmp.eq.f32.partialorder %v1304, 0.0
        %v1306 = vsel %vm1305, 1, 0
        %vm1307 = vcmp.eq.s32.totalorder %v1306, 1
        %v1308 = vsel %vm1307, -1e+20, %v1300
        %v1309 = vsel %vm1307, -1e+20, %v1301
        %v1310 = vsel %vm1307, -1e+20, %v1302
        %v1311 = vsel %vm1307, -1e+20, %v1303
        %v1312 = vsel %vm425, %v1308, -inf
        %1313 = vmax.xlane.f32.xlu0 %v1312
        %v1314 = vpop.xlane.xlu0 %1313
        %v1315 = vsel %vm425, %v1309, -inf
        %1316 = vmax.xlane.f32.xlu0 %v1315
        %v1317 = vpop.xlane.xlu0 %1316
        %v1318 = vsel %vm425, %v1310, -inf
        %1319 = vmax.xlane.f32.xlu0 %v1318
        %v1320 = vpop.xlane.xlu0 %1319
        %v1321 = vsel %vm425, %v1311, -inf
        %1322 = vmax.xlane.f32.xlu0 %v1321
        %v1323 = vpop.xlane.xlu0 %1322
        %v1324 = vsub.f32 %v1308, %v1314
        %v1325 = vsub.f32 %v1309, %v1317
        %v1326 = vsub.f32 %v1310, %v1320
        %v1327 = vsub.f32 %v1311, %v1323
        %v1328 = vmul.f32 %v1324, 1.442695
        %v1329 = vpow.pop %v1328
        %v1330 = vmul.f32 %v1325, 1.442695
        %v1331 = vpow.pop %v1330
        %v1332 = vmul.f32 %v1326, 1.442695
        %v1333 = vpow.pop %v1332
        %v1334 = vmul.f32 %v1327, 1.442695
        %v1335 = vpow.pop %v1334
        %v1336 = vsel %vm425, %v1329, 0.0
        %1337 = vadd.xlane.f32.xlu0 %v1336
        %v1338 = vpop.xlane.xlu0 %1337
        %v1339 = vsel %vm425, %v1331, 0.0
        %1340 = vadd.xlane.f32.xlu0 %v1339
        %v1341 = vpop.xlane.xlu0 %1340
        %v1342 = vsel %vm425, %v1333, 0.0
        %1343 = vadd.xlane.f32.xlu0 %v1342
        %v1344 = vpop.xlane.xlu0 %1343
        %v1345 = vsel %vm425, %v1335, 0.0
        %1346 = vadd.xlane.f32.xlu0 %v1345
        %v1347 = vpop.xlane.xlu0 %1346
        %v1348 = vrcp.pop %v1338
        %v1349 = vrcp.pop %v1341
        %v1350 = vrcp.pop %v1344
        %v1351 = vrcp.pop %v1347
        %v1352 = vmul.f32 %v1329, %v1348
        %v1353 = vmul.f32 %v1331, %v1349
        %v1354 = vmul.f32 %v1333, %v1350
        %v1355 = vmul.f32 %v1335, %v1351
        %v1358 = vcombine.low %v936, %v970
        %v1361 = vsel %vm425, %v1352, 0
        %1363 = vmatprep.subr.mxu0 0.0
        %1364 = vmatpush1.msra.mxu0 %v1358
        %1365 = vmatprep.subr.mxu0 0.0
        %1366 = vmatpush1.msra.mxu0 0.0
        %1367 = vmatprep.subr.mxu0 0.0
        %1368 = vmatpush1.msra.mxu0 0.0
        %1369 = vmatprep.subr.mxu0 0.0
        %1370 = vmatpush1.msra.mxu0 0.0
        %1371 = vmatprep.subr.mxu0 0.0
        %1372 = vmatpush1.msra.mxu0 0.0
        %1373 = vmatprep.subr.mxu0 0.0
        %1374 = vmatpush1.msra.mxu0 0.0
        %1375 = vmatprep.subr.mxu0 0.0
        %1376 = vmatpush1.msra.mxu0 0.0
        %1377 = vmatprep.subr.mxu0 0.0
        %1378 = vmatpush1.msra.mxu0 0.0
        %1379 = vmatprep.subr.mxu0 0.0
        %1380 = vmatpush1.msra.mxu0 0.0
        %1381 = vmatprep.subr.mxu0 0.0
        %1382 = vmatpush1.msra.mxu0 0.0
        %1383 = vmatprep.subr.mxu0 0.0
        %1384 = vmatpush1.msra.mxu0 0.0
        %1385 = vmatprep.subr.mxu0 0.0
        %1386 = vmatpush1.msra.mxu0 0.0
        %1387 = vmatprep.subr.mxu0 0.0
        %1388 = vmatpush1.msra.mxu0 0.0
        %1389 = vmatprep.subr.mxu0 0.0
        %1390 = vmatpush1.msra.mxu0 0.0
        %1391 = vmatprep.subr.mxu0 0.0
        %1392 = vmatpush1.msra.mxu0 0.0
        %1393 = vmatprep.subr.mxu0 0.0
        %1394 = vmatpush1.msra.mxu0 0.0
        %1395 = vmatprep.subr.mxu0 0.0
        %1396 = vmatpush1.msra.mxu0 0.0
        %1397 = vmatprep.subr.mxu0 0.0
        %1398 = vmatpush1.msra.mxu0 0.0
        %1399 = vmatprep.subr.mxu0 0.0
        %1400 = vmatpush1.msra.mxu0 0.0
        %1401 = vmatprep.subr.mxu0 0.0
        %1402 = vmatpush1.msra.mxu0 0.0
        %1403 = vmatprep.subr.mxu0 0.0
        %1404 = vmatpush1.msra.mxu0 0.0
        %1405 = vmatprep.subr.mxu0 0.0
        %1406 = vmatpush1.msra.mxu0 0.0
        %1407 = vmatprep.subr.mxu0 0.0
        %1408 = vmatpush1.msra.mxu0 0.0
        %1409 = vmatprep.subr.mxu0 0.0
        %1410 = vmatpush1.msra.mxu0 0.0
        %1411 = vmatprep.subr.mxu0 0.0
        %1412 = vmatpush1.msra.mxu0 0.0
        %1413 = vmatprep.subr.mxu0 0.0
        %1414 = vmatpush1.msra.mxu0 0.0
        %1415 = vmatprep.subr.mxu0 0.0
        %1416 = vmatpush1.msra.mxu0 0.0
        %1417 = vmatprep.subr.mxu0 0.0
        %1418 = vmatpush1.msra.mxu0 0.0
        %1419 = vmatprep.subr.mxu0 0.0
        %1420 = vmatpush1.msra.mxu0 0.0
        %1421 = vmatprep.subr.mxu0 0.0
        %1422 = vmatpush1.msra.mxu0 0.0
        %1423 = vmatprep.subr.mxu0 0.0
        %1424 = vmatpush1.msra.mxu0 0.0
        %1425 = vmatprep.subr.mxu0 0.0
        %1426 = vmatpush1.msra.mxu0 0.0
        %1427 = vmatprep.mubr.f32.mxu0 0.0
        %1428 = vmatmul.mubr.f32.gmra.mrb[0].mxu0 %v1361
        %v1429 = vpop.f32.mrb[0].mxu0
        %v1430 = vadd.f32 0.0, %v1429
        %v1431 = vpop.f32.mrb[0].mxu0
        %1432 = vdwg.mxu0
        %v1435 = vcombine.low %v944, %v978
        %v1438 = vsel %vm425, %v1353, 0
        %1440 = vmatprep.subr.mxu0 0.0
        %1441 = vmatpush1.msra.mxu0 %v1435
        %1442 = vmatprep.subr.mxu0 0.0
        %1443 = vmatpush1.msra.mxu0 0.0
        %1444 = vmatprep.subr.mxu0 0.0
        %1445 = vmatpush1.msra.mxu0 0.0
        %1446 = vmatprep.subr.mxu0 0.0
        %1447 = vmatpush1.msra.mxu0 0.0
        %1448 = vmatprep.subr.mxu0 0.0
        %1449 = vmatpush1.msra.mxu0 0.0
        %1450 = vmatprep.subr.mxu0 0.0
        %1451 = vmatpush1.msra.mxu0 0.0
        %1452 = vmatprep.subr.mxu0 0.0
        %1453 = vmatpush1.msra.mxu0 0.0
        %1454 = vmatprep.subr.mxu0 0.0
        %1455 = vmatpush1.msra.mxu0 0.0
        %1456 = vmatprep.subr.mxu0 0.0
        %1457 = vmatpush1.msra.mxu0 0.0
        %1458 = vmatprep.subr.mxu0 0.0
        %1459 = vmatpush1.msra.mxu0 0.0
        %1460 = vmatprep.subr.mxu0 0.0
        %1461 = vmatpush1.msra.mxu0 0.0
        %1462 = vmatprep.subr.mxu0 0.0
        %1463 = vmatpush1.msra.mxu0 0.0
        %1464 = vmatprep.subr.mxu0 0.0
        %1465 = vmatpush1.msra.mxu0 0.0
        %1466 = vmatprep.subr.mxu0 0.0
        %1467 = vmatpush1.msra.mxu0 0.0
        %1468 = vmatprep.subr.mxu0 0.0
        %1469 = vmatpush1.msra.mxu0 0.0
        %1470 = vmatprep.subr.mxu0 0.0
        %1471 = vmatpush1.msra.mxu0 0.0
        %1472 = vmatprep.subr.mxu0 0.0
        %1473 = vmatpush1.msra.mxu0 0.0
        %1474 = vmatprep.subr.mxu0 0.0
        %1475 = vmatpush1.msra.mxu0 0.0
        %1476 = vmatprep.subr.mxu0 0.0
        %1477 = vmatpush1.msra.mxu0 0.0
        %1478 = vmatprep.subr.mxu0 0.0
        %1479 = vmatpush1.msra.mxu0 0.0
        %1480 = vmatprep.subr.mxu0 0.0
        %1481 = vmatpush1.msra.mxu0 0.0
        %1482 = vmatprep.subr.mxu0 0.0
        %1483 = vmatpush1.msra.mxu0 0.0
        %1484 = vmatprep.subr.mxu0 0.0
        %1485 = vmatpush1.msra.mxu0 0.0
        %1486 = vmatprep.subr.mxu0 0.0
        %1487 = vmatpush1.msra.mxu0 0.0
        %1488 = vmatprep.subr.mxu0 0.0
        %1489 = vmatpush1.msra.mxu0 0.0
        %1490 = vmatprep.subr.mxu0 0.0
        %1491 = vmatpush1.msra.mxu0 0.0
        %1492 = vmatprep.subr.mxu0 0.0
        %1493 = vmatpush1.msra.mxu0 0.0
        %1494 = vmatprep.subr.mxu0 0.0
        %1495 = vmatpush1.msra.mxu0 0.0
        %1496 = vmatprep.subr.mxu0 0.0
        %1497 = vmatpush1.msra.mxu0 0.0
        %1498 = vmatprep.subr.mxu0 0.0
        %1499 = vmatpush1.msra.mxu0 0.0
        %1500 = vmatprep.subr.mxu0 0.0
        %1501 = vmatpush1.msra.mxu0 0.0
        %1502 = vmatprep.subr.mxu0 0.0
        %1503 = vmatpush1.msra.mxu0 0.0
        %1504 = vmatprep.mubr.f32.mxu0 0.0
        %1505 = vmatmul.mubr.f32.gmra.mrb[0].mxu0 %v1438
        %v1506 = vpop.f32.mrb[0].mxu0
        %v1507 = vadd.f32 0.0, %v1506
        %v1508 = vpop.f32.mrb[0].mxu0
        %1509 = vdwg.mxu0
        %v1512 = vcombine.low %v943, %v977
        %v1515 = vsel %vm425, %v1354, 0
        %1517 = vmatprep.subr.mxu0 0.0
        %1518 = vmatpush1.msra.mxu0 %v1512
        %1519 = vmatprep.subr.mxu0 0.0
        %1520 = vmatpush1.msra.mxu0 0.0
        %1521 = vmatprep.subr.mxu0 0.0
        %1522 = vmatpush1.msra.mxu0 0.0
        %1523 = vmatprep.subr.mxu0 0.0
        %1524 = vmatpush1.msra.mxu0 0.0
        %1525 = vmatprep.subr.mxu0 0.0
        %1526 = vmatpush1.msra.mxu0 0.0
        %1527 = vmatprep.subr.mxu0 0.0
        %1528 = vmatpush1.msra.mxu0 0.0
        %1529 = vmatprep.subr.mxu0 0.0
        %1530 = vmatpush1.msra.mxu0 0.0
        %1531 = vmatprep.subr.mxu0 0.0
        %1532 = vmatpush1.msra.mxu0 0.0
        %1533 = vmatprep.subr.mxu0 0.0
        %1534 = vmatpush1.msra.mxu0 0.0
        %1535 = vmatprep.subr.mxu0 0.0
        %1536 = vmatpush1.msra.mxu0 0.0
        %1537 = vmatprep.subr.mxu0 0.0
        %1538 = vmatpush1.msra.mxu0 0.0
        %1539 = vmatprep.subr.mxu0 0.0
        %1540 = vmatpush1.msra.mxu0 0.0
        %1541 = vmatprep.subr.mxu0 0.0
        %1542 = vmatpush1.msra.mxu0 0.0
        %1543 = vmatprep.subr.mxu0 0.0
        %1544 = vmatpush1.msra.mxu0 0.0
        %1545 = vmatprep.subr.mxu0 0.0
        %1546 = vmatpush1.msra.mxu0 0.0
        %1547 = vmatprep.subr.mxu0 0.0
        %1548 = vmatpush1.msra.mxu0 0.0
        %1549 = vmatprep.subr.mxu0 0.0
        %1550 = vmatpush1.msra.mxu0 0.0
        %1551 = vmatprep.subr.mxu0 0.0
        %1552 = vmatpush1.msra.mxu0 0.0
        %1553 = vmatprep.subr.mxu0 0.0
        %1554 = vmatpush1.msra.mxu0 0.0
        %1555 = vmatprep.subr.mxu0 0.0
        %1556 = vmatpush1.msra.mxu0 0.0
        %1557 = vmatprep.subr.mxu0 0.0
        %1558 = vmatpush1.msra.mxu0 0.0
        %1559 = vmatprep.subr.mxu0 0.0
        %1560 = vmatpush1.msra.mxu0 0.0
        %1561 = vmatprep.subr.mxu0 0.0
        %1562 = vmatpush1.msra.mxu0 0.0
        %1563 = vmatprep.subr.mxu0 0.0
        %1564 = vmatpush1.msra.mxu0 0.0
        %1565 = vmatprep.subr.mxu0 0.0
        %1566 = vmatpush1.msra.mxu0 0.0
        %1567 = vmatprep.subr.mxu0 0.0
        %1568 = vmatpush1.msra.mxu0 0.0
        %1569 = vmatprep.subr.mxu0 0.0
        %1570 = vmatpush1.msra.mxu0 0.0
        %1571 = vmatprep.subr.mxu0 0.0
        %1572 = vmatpush1.msra.mxu0 0.0
        %1573 = vmatprep.subr.mxu0 0.0
        %1574 = vmatpush1.msra.mxu0 0.0
        %1575 = vmatprep.subr.mxu0 0.0
        %1576 = vmatpush1.msra.mxu0 0.0
        %1577 = vmatprep.subr.mxu0 0.0
        %1578 = vmatpush1.msra.mxu0 0.0
        %1579 = vmatprep.subr.mxu0 0.0
        %1580 = vmatpush1.msra.mxu0 0.0
        %1581 = vmatprep.mubr.f32.mxu0 0.0
        %1582 = vmatmul.mubr.f32.gmra.mrb[0].mxu0 %v1515
        %v1583 = vpop.f32.mrb[0].mxu0
        %v1584 = vadd.f32 0.0, %v1583
        %v1585 = vpop.f32.mrb[0].mxu0
        %1586 = vdwg.mxu0
        %v1589 = vcombine.low %v945, %v979
        %v1592 = vsel %vm425, %v1355, 0
        %1594 = vmatprep.subr.mxu0 0.0
        %1595 = vmatpush1.msra.mxu0 %v1589
        %1596 = vmatprep.subr.mxu0 0.0
        %1597 = vmatpush1.msra.mxu0 0.0
        %1598 = vmatprep.subr.mxu0 0.0
        %1599 = vmatpush1.msra.mxu0 0.0
        %1600 = vmatprep.subr.mxu0 0.0
        %1601 = vmatpush1.msra.mxu0 0.0
        %1602 = vmatprep.subr.mxu0 0.0
        %1603 = vmatpush1.msra.mxu0 0.0
        %1604 = vmatprep.subr.mxu0 0.0
        %1605 = vmatpush1.msra.mxu0 0.0
        %1606 = vmatprep.subr.mxu0 0.0
        %1607 = vmatpush1.msra.mxu0 0.0
        %1608 = vmatprep.subr.mxu0 0.0
        %1609 = vmatpush1.msra.mxu0 0.0
        %1610 = vmatprep.subr.mxu0 0.0
        %1611 = vmatpush1.msra.mxu0 0.0
        %1612 = vmatprep.subr.mxu0 0.0
        %1613 = vmatpush1.msra.mxu0 0.0
        %1614 = vmatprep.subr.mxu0 0.0
        %1615 = vmatpush1.msra.mxu0 0.0
        %1616 = vmatprep.subr.mxu0 0.0
        %1617 = vmatpush1.msra.mxu0 0.0
        %1618 = vmatprep.subr.mxu0 0.0
        %1619 = vmatpush1.msra.mxu0 0.0
        %1620 = vmatprep.subr.mxu0 0.0
        %1621 = vmatpush1.msra.mxu0 0.0
        %1622 = vmatprep.subr.mxu0 0.0
        %1623 = vmatpush1.msra.mxu0 0.0
        %1624 = vmatprep.subr.mxu0 0.0
        %1625 = vmatpush1.msra.mxu0 0.0
        %1626 = vmatprep.subr.mxu0 0.0
        %1627 = vmatpush1.msra.mxu0 0.0
        %1628 = vmatprep.subr.mxu0 0.0
        %1629 = vmatpush1.msra.mxu0 0.0
        %1630 = vmatprep.subr.mxu0 0.0
        %1631 = vmatpush1.msra.mxu0 0.0
        %1632 = vmatprep.subr.mxu0 0.0
        %1633 = vmatpush1.msra.mxu0 0.0
        %1634 = vmatprep.subr.mxu0 0.0
        %1635 = vmatpush1.msra.mxu0 0.0
        %1636 = vmatprep.subr.mxu0 0.0
        %1637 = vmatpush1.msra.mxu0 0.0
        %1638 = vmatprep.subr.mxu0 0.0
        %1639 = vmatpush1.msra.mxu0 0.0
        %1640 = vmatprep.subr.mxu0 0.0
        %1641 = vmatpush1.msra.mxu0 0.0
        %1642 = vmatprep.subr.mxu0 0.0
        %1643 = vmatpush1.msra.mxu0 0.0
        %1644 = vmatprep.subr.mxu0 0.0
        %1645 = vmatpush1.msra.mxu0 0.0
        %1646 = vmatprep.subr.mxu0 0.0
        %1647 = vmatpush1.msra.mxu0 0.0
        %1648 = vmatprep.subr.mxu0 0.0
        %1649 = vmatpush1.msra.mxu0 0.0
        %1650 = vmatprep.subr.mxu0 0.0
        %1651 = vmatpush1.msra.mxu0 0.0
        %1652 = vmatprep.subr.mxu0 0.0
        %1653 = vmatpush1.msra.mxu0 0.0
        %1654 = vmatprep.subr.mxu0 0.0
        %1655 = vmatpush1.msra.mxu0 0.0
        %1656 = vmatprep.subr.mxu0 0.0
        %1657 = vmatpush1.msra.mxu0 0.0
        %1658 = vmatprep.mubr.f32.mxu0 0.0
        %1659 = vmatmul.mubr.f32.gmra.mrb[0].mxu0 %v1592
        %v1660 = vpop.f32.mrb[0].mxu0
        %v1661 = vadd.f32 0.0, %v1660
        %v1662 = vpop.f32.mrb[0].mxu0
        %1663 = vdwg.mxu0
        %v1664 = vcombine.low %v1430, %v1584
        %v1665 = vcombine.high %v1430, %v1584
        %v1667 = vunpack.c.l.s4 1983009808
        %v1668 = vunpack.c.0.s8 %v1667
        %v1669 = vlaneseq
        %v1670 = vshrl.u32 %v1669, 7
        %v1671 = vsub.s32 %v1668, %v1670
        %v1672 = vrot.slane %v1664, %v1671
        %v1674 = vunpack.c.l.s4 1983009808
        %v1675 = vunpack.c.0.s8 %v1674
        %v1676 = vlaneseq
        %v1677 = vshrl.u32 %v1676, 7
        %v1678 = vsub.s32 %v1675, %v1677
        %v1679 = vrot.slane %v1665, %v1678
        %v1680 = vcombine.low %v1507, %v1661
        %v1681 = vcombine.high %v1507, %v1661
        %v1683 = vunpack.c.l.s4 1983009808
        %v1684 = vunpack.c.0.s8 %v1683
        %v1685 = vlaneseq
        %v1686 = vshrl.u32 %v1685, 7
        %v1687 = vsub.s32 %v1684, %v1686
        %v1688 = vrot.slane %v1680, %v1687
        %v1690 = vunpack.c.l.s4 1983009808
        %v1691 = vunpack.c.0.s8 %v1690
        %v1692 = vlaneseq
        %v1693 = vshrl.u32 %v1692, 7
        %v1694 = vsub.s32 %v1691, %v1693
        %v1695 = vrot.slane %v1681, %v1694
        %v1696 = vcombine.low %v1672, %v1688
        %v1697 = vcombine.high %v1672, %v1688
        %v1699 = vunpack.c.l.s4 1934713408
        %v1700 = vunpack.c.0.s8 %v1699
        %v1701 = vlaneseq
        %v1702 = vshrl.u32 %v1701, 7
        %v1703 = vsub.s32 %v1700, %v1702
        %v1704 = vrot.slane %v1696, %v1703
        %v1706 = vunpack.c.l.s4 1934713408
        %v1707 = vunpack.c.0.s8 %v1706
        %v1708 = vlaneseq
        %v1709 = vshrl.u32 %v1708, 7
        %v1710 = vsub.s32 %v1707, %v1709
        %v1711 = vrot.slane %v1697, %v1710
        %v1712 = vcombine.low %v1679, %v1695
        %v1713 = vcombine.high %v1679, %v1695
        %v1715 = vunpack.c.l.s4 1934713408
        %v1716 = vunpack.c.0.s8 %v1715
        %v1717 = vlaneseq
        %v1718 = vshrl.u32 %v1717, 7
        %v1719 = vsub.s32 %v1716, %v1718
        %v1720 = vrot.slane %v1712, %v1719
        %v1722 = vunpack.c.l.s4 1934713408
        %v1723 = vunpack.c.0.s8 %v1722
        %v1724 = vlaneseq
        %v1725 = vshrl.u32 %v1724, 7
        %v1726 = vsub.s32 %v1723, %v1725
        %v1727 = vrot.slane %v1713, %v1726
        %v1728 = vcombine.high %v1704, 0.0
        %v1729 = vcombine.high %v1711, 0.0
        %v1730 = vcombine.high %v1720, 0.0
        %v1731 = vcombine.high %v1727, 0.0
        %v1732 = vcombine.low %v1704, %v1711
        %v1734 = vunpack.c.l.s4 1983009808
        %v1735 = vunpack.c.0.s8 %v1734
        %v1736 = vlaneseq
        %v1737 = vshrl.u32 %v1736, 7
        %v1738 = vsub.s32 %v1735, %v1737
        %v1739 = vrot.slane %v1732, %v1738
        %v1740 = vcombine.low %v1728, %v1729
        %v1742 = vunpack.c.l.s4 1983009808
        %v1743 = vunpack.c.0.s8 %v1742
        %v1744 = vlaneseq
        %v1745 = vshrl.u32 %v1744, 7
        %v1746 = vsub.s32 %v1743, %v1745
        %v1747 = vrot.slane %v1740, %v1746
        %v1748 = vcombine.low %v1720, %v1727
        %v1750 = vunpack.c.l.s4 1983009808
        %v1751 = vunpack.c.0.s8 %v1750
        %v1752 = vlaneseq
        %v1753 = vshrl.u32 %v1752, 7
        %v1754 = vsub.s32 %v1751, %v1753
        %v1755 = vrot.slane %v1748, %v1754
        %v1756 = vcombine.low %v1730, %v1731
        %v1758 = vunpack.c.l.s4 1983009808
        %v1759 = vunpack.c.0.s8 %v1758
        %v1760 = vlaneseq
        %v1761 = vshrl.u32 %v1760, 7
        %v1762 = vsub.s32 %v1759, %v1761
        %v1763 = vrot.slane %v1756, %v1762
        %v1764 = vcombine.low %v1739, %v1747
        %v1765 = vcombine.high %v1739, %v1747
        %v1767 = vunpack.c.l.s4 1934713408
        %v1768 = vunpack.c.0.s8 %v1767
        %v1769 = vlaneseq
        %v1770 = vshrl.u32 %v1769, 7
        %v1771 = vsub.s32 %v1768, %v1770
        %v1772 = vrot.slane %v1764, %v1771
        %v1774 = vunpack.c.l.s4 1934713408
        %v1775 = vunpack.c.0.s8 %v1774
        %v1776 = vlaneseq
        %v1777 = vshrl.u32 %v1776, 7
        %v1778 = vsub.s32 %v1775, %v1777
        %v1779 = vrot.slane %v1765, %v1778
        %v1780 = vcombine.low %v1755, %v1763
        %v1781 = vcombine.high %v1755, %v1763
        %v1783 = vunpack.c.l.s4 1934713408
        %v1784 = vunpack.c.0.s8 %v1783
        %v1785 = vlaneseq
        %v1786 = vshrl.u32 %v1785, 7
        %v1787 = vsub.s32 %v1784, %v1786
        %v1788 = vrot.slane %v1780, %v1787
        %v1790 = vunpack.c.l.s4 1934713408
        %v1791 = vunpack.c.0.s8 %v1790
        %v1792 = vlaneseq
        %v1793 = vshrl.u32 %v1792, 7
        %v1794 = vsub.s32 %v1791, %v1793
        %v1795 = vrot.slane %v1781, %v1794
        %v1796 = vcombine.low %v1772, %v1788
        %v1797 = vcombine.high %v1772, %v1788
        %v1798 = vcombine.low %v1779, %v1795
        %v1799 = vcombine.high %v1779, %v1795
        %1801 = vrot.lane.b32.xlu0 %v1797, 8
        %v1802 = vpop.permute.xlu0 %1801
        %1805 = vrot.lane.b32.xlu0 %v1798, 16
        %v1806 = vpop.permute.xlu0 %1805
        %1809 = vrot.lane.b32.xlu0 %v1799, 24
        %v1810 = vpop.permute.xlu0 %1809
        %v1812 = vsel %vm425, %v1796, %v1802
        %vm1813 = vcmask 130048
        %v1814 = vsel %vm1813, %v1812, %v1806
        %vm1815 = vcmask 195584
        %v1816 = vsel %vm1815, %v1814, %v1810
        %v1817 = vld [vmem:[%s7] sm:$0xff]
        %v1818 = vld [vmem:[%s7 + $0x8] sm:$0xff]
        %v1819 = vld [vmem:[%s7 + $0x10] sm:$0xff]
        %v1820 = vld [vmem:[%s7 + $0x18] sm:$0xff]
        %v1821 = vld [vmem:[%s8] sm:$0x1]
        %v1823 = vlaneseq
        %v1824 = vshrl.u32 %v1823, 7
        %v1825 = vsub.s32 0, %v1824
        %v1826 = vrot.slane %v1821, %v1825
        %vm1828 = vcmask 261120
        %v1830 = vsel %vm1828, %v1816, 0
        %v1833 = vsel %vm1828, %v1817, 0
        %v1836 = vsel %vm1828, %v1818, 0
        %v1839 = vsel %vm1828, %v1819, 0
        %v1842 = vsel %vm1828, %v1820, 0
        %1844 = vmatprep.subr.mxu0 0.0
        %1845 = vmatpush1.xpose.msra.mxu0 %v1833
        %1846 = vmatprep.subr.mxu0 0.0
        %1847 = vmatpush1.xpose.msra.mxu0 %v1836
        %1848 = vmatprep.subr.mxu0 0.0
        %1849 = vmatpush1.xpose.msra.mxu0 %v1839
        %1850 = vmatprep.subr.mxu0 0.0
        %1851 = vmatpush1.xpose.msra.mxu0 %v1842
        %1852 = vmatprep.subr.mxu0 0.0
        %1853 = vmatpush1.xpose.msra.mxu0 0.0
        %1854 = vmatprep.subr.mxu0 0.0
        %1855 = vmatpush1.xpose.msra.mxu0 0.0
        %1856 = vmatprep.subr.mxu0 0.0
        %1857 = vmatpush1.xpose.msra.mxu0 0.0
        %1858 = vmatprep.subr.mxu0 0.0
        %1859 = vmatpush1.xpose.msra.mxu0 0.0
        %1860 = vmatprep.subr.mxu0 0.0
        %1861 = vmatpush1.xpose.msra.mxu0 0.0
        %1862 = vmatprep.subr.mxu0 0.0
        %1863 = vmatpush1.xpose.msra.mxu0 0.0
        %1864 = vmatprep.subr.mxu0 0.0
        %1865 = vmatpush1.xpose.msra.mxu0 0.0
        %1866 = vmatprep.subr.mxu0 0.0
        %1867 = vmatpush1.xpose.msra.mxu0 0.0
        %1868 = vmatprep.subr.mxu0 0.0
        %1869 = vmatpush1.xpose.msra.mxu0 0.0
        %1870 = vmatprep.subr.mxu0 0.0
        %1871 = vmatpush1.xpose.msra.mxu0 0.0
        %1872 = vmatprep.subr.mxu0 0.0
        %1873 = vmatpush1.xpose.msra.mxu0 0.0
        %1874 = vmatprep.subr.mxu0 0.0
        %1875 = vmatpush1.xpose.msra.mxu0 0.0
        %1876 = vmatprep.subr.mxu0 0.0
        %1877 = vmatpush1.xpose.msra.mxu0 0.0
        %1878 = vmatprep.subr.mxu0 0.0
        %1879 = vmatpush1.xpose.msra.mxu0 0.0
        %1880 = vmatprep.subr.mxu0 0.0
        %1881 = vmatpush1.xpose.msra.mxu0 0.0
        %1882 = vmatprep.subr.mxu0 0.0
        %1883 = vmatpush1.xpose.msra.mxu0 0.0
        %1884 = vmatprep.subr.mxu0 0.0
        %1885 = vmatpush1.xpose.msra.mxu0 0.0
        %1886 = vmatprep.subr.mxu0 0.0
        %1887 = vmatpush1.xpose.msra.mxu0 0.0
        %1888 = vmatprep.subr.mxu0 0.0
        %1889 = vmatpush1.xpose.msra.mxu0 0.0
        %1890 = vmatprep.subr.mxu0 0.0
        %1891 = vmatpush1.xpose.msra.mxu0 0.0
        %1892 = vmatprep.subr.mxu0 0.0
        %1893 = vmatpush1.xpose.msra.mxu0 0.0
        %1894 = vmatprep.subr.mxu0 0.0
        %1895 = vmatpush1.xpose.msra.mxu0 0.0
        %1896 = vmatprep.subr.mxu0 0.0
        %1897 = vmatpush1.xpose.msra.mxu0 0.0
        %1898 = vmatprep.subr.mxu0 0.0
        %1899 = vmatpush1.xpose.msra.mxu0 0.0
        %1900 = vmatprep.subr.mxu0 0.0
        %1901 = vmatpush1.xpose.msra.mxu0 0.0
        %1902 = vmatprep.subr.mxu0 0.0
        %1903 = vmatpush1.xpose.msra.mxu0 0.0
        %1904 = vmatprep.subr.mxu0 0.0
        %1905 = vmatpush1.xpose.msra.mxu0 0.0
        %1906 = vmatprep.subr.mxu0 0.0
        %1907 = vmatpush1.xpose.msra.mxu0 0.0
        %1908 = vmatprep.mubr.f32.mxu0 0.0
        %1909 = vmatmul.mubr.f32.gmra.mrb[0].mxu0 %v1830
        %v1910 = vpop.f32.mrb[0].mxu0
        %v1911 = vadd.f32 %v1826, %v1910
        %v1912 = vpop.f32.mrb[0].mxu0
        %1913 = vdwg.mxu0
        %1914 = vst.msk [vmem:[%s368] sm:$0xff] %vm1828, %v1911
        %s1915 = sand.u32 %s240, 1
        %s1916 = scalar_lea.sflag [#allocation3], %s1915
        %s1917 = sand.u32 %s240, 1
        %s1918 = smul.addr %s1917, 8
        %s1919 = scalar_lea.vmem [#allocation2], %s1918
        // Predicated region
        $region57: #{self_attention_forward.1} parent=55 // pred_check
          %p1920 = pneg %p250
        $region58: #{self_attention_forward.1} parent=55 // pred_check_branch
          %1922 = sbr.rel (%p1920) target = $region60
        $region59: #{self_attention_forward.1} parent=55 // pred_region
          %s1924 = ssub.s32 128, 128
          %1925 = vsyncadd %s1916, %s1924
          %s1926 = smul.addr %s23, 128
          %s1927 = scalar_lea.hbm %s9, %s1926
          %s1929 = sshll.u32 %s1919, 4
          %s1930 = int_to_ptr.vmem [resolvable:$true] %s1929
          %1932 = dma.vmem_to_hbm [thread:$0]  %s1930, 128, %s1927, %s1916
        $region60: #{self_attention_forward.1} parent=55 // pred_fallthru
          _
      $region56: #{self_attention_forward.1} parent=5 // pred_fallthru
        _
      %p1933 = scmp.le.s32.totalorder 2, %s18
      // Predicated region
      $region61: #{self_attention_forward.1} parent=5 // pred_check
        %p1934 = pneg %p1933
      $region62: #{self_attention_forward.1} parent=5 // pred_check_branch
        %1936 = sbr.rel (%p1934) target = $region64
      $region63: #{self_attention_forward.1} parent=5 // pred_region
        %s1937 = ssub.s32 %s18, 2
        // Predicated region
        $region65: #{self_attention_forward.1} parent=63 // pred_check
          %p1938 = pneg %p256
        $region66: #{self_attention_forward.1} parent=63 // pred_check_branch
          %1940 = sbr.rel (%p1938) target = $region68
        $region67: #{self_attention_forward.1} parent=63 // pred_region
          %s1941 = sand.u32 %s241, 1
          %s1942 = scalar_lea.sflag [#allocation3], %s1941
          %s1943 = sand.u32 %s241, 1
          %s1944 = smul.addr %s1943, 8
          %s1945 = scalar_lea.vmem [#allocation2], %s1944
          %1946 = dma.done %s1942, 128
        $region68: #{self_attention_forward.1} parent=63 // pred_fallthru
          _
      $region64: #{self_attention_forward.1} parent=5 // pred_fallthru
        _
    $region6: #{self_attention_forward.1} parent=1 // loop_footer
      %s22 = sadd.s32 1, %s18
    $region7: #{self_attention_forward.1} parent=1 // loop_footer_branch
      %17 = sbr.rel target = $region3
    $region8: #{self_attention_forward.1} parent=1 // loop_exit
      _
    %1947 = vsyncpa [#allocation3], 1
    %s1948 = scalar_lea.sflag [#allocation3], 1
    %1949 = vsyncpa %s1948, 1

</llo_original>
